<compile_context>
chip_gen: v6e
topology: v6e:2x2x1
jax: 0.10.0
libtpu: 0.0.40
codegen_flags: <defaults>
</compile_context>

<pallas_src>
import functools
import math

import jax
import jax.numpy as jnp
from jax.experimental import pallas as pl
from jax.experimental.pallas import tpu as pltpu


# ----------------------------------------------------------------------------
# Generation-aware tiling / VMEM budget
# ----------------------------------------------------------------------------
def _vmem_capacity_bytes():
    try:
        info = pltpu.get_tpu_info()
        cap = getattr(info, "vmem_capacity_bytes", None)
        if cap:
            return int(cap)
    except Exception:
        pass
    return 64 * 1024 * 1024  # conservative (v7x-sized) default


_VMEM_CAP = _vmem_capacity_bytes()
if _VMEM_CAP >= 100 * 1024 * 1024:          # v5e / v6e: 128 MiB physical VMEM
    _VMEM_LIMIT = 96 * 1024 * 1024
    _TM_TARGET, _TN_TARGET, _TH_TARGET = 512, 1024, 1024
else:                                        # v7x: 64 MiB physical (or unknown)
    _VMEM_LIMIT = 48 * 1024 * 1024
    _TM_TARGET, _TN_TARGET, _TH_TARGET = 256, 512, 512


def _pick_tile(dim, target, align):
    """Full dim if it fits; else the largest aligned divisor <= target; else an
    aligned non-divisor tile (ragged edges handled by Pallas masking)."""
    if dim <= target:
        return dim
    for cand in range(target, align - 1, -align):
        if dim % cand == 0:
            return cand
    return max(align, (target // align) * align)


def _q_tile(T):
    """Query-tile size for attention: a divisor of T, at most ~256."""
    if T <= 256:
        return T
    for cand in (256, 128, 512, 1024, 64):
        if T % cand == 0:
            return cand
    return T


# ----------------------------------------------------------------------------
# Fused (LayerNorm) + Linear (+ activation) kernel
# ----------------------------------------------------------------------------
def _fused_linear_kernel(*refs, has_ln, activation):
    idx = 0
    x_ref = refs[idx]; idx += 1
    if has_ln:
        g_ref, lb_ref = refs[idx], refs[idx + 1]; idx += 2
    w_ref, b_ref, o_ref = refs[idx], refs[idx + 1], refs[idx + 2]

    x = x_ref[...].astype(jnp.float32)
    if has_ln:
        mu = jnp.mean(x, axis=-1, keepdims=True)
        var = jnp.mean(jnp.square(x - mu), axis=-1, keepdims=True)
        x = (x - mu) * jax.lax.rsqrt(var + 1e-5) * g_ref[...] + lb_ref[...]
    y = jnp.dot(x.astype(jnp.bfloat16), w_ref[...],
                preferred_element_type=jnp.float32) + b_ref[...]
    if activation == "gelu":
        # TODO(synk): PyTorch nn.GELU defaults to exact erf; tanh approximation used.
        y = jax.nn.gelu(y, approximate=True)
    elif activation == "sigmoid":
        y = jax.nn.sigmoid(y)
    o_ref[...] = y.astype(o_ref.dtype)


def fused_linear(x, w, b, *, ln=None, activation=None, out_dtype=jnp.float32):
    """y = act(LN(x) @ W + b).  x: (M, K) f32, w: (K, N) bf16, b: (N,) f32."""
    M, K = x.shape
    N = w.shape[1]
    tm = _pick_tile(M, _TM_TARGET, 8)
    tn = _pick_tile(N, _TN_TARGET, 128)
    gm, gn = pl.cdiv(M, tm), pl.cdiv(N, tn)

    # Choose the grid loop order so the operand whose re-streaming would cost
    # more HBM traffic keeps a constant block index along the inner axis
    # (Pallas skips the re-DMA when the block index does not change).
    x_bytes = M * K * x.dtype.itemsize
    w_bytes = K * N * w.dtype.itemsize
    m_outer = (x_bytes + w_bytes * gm) <= (w_bytes + x_bytes * gn)
    if m_outer:                       # inner axis = n tiles; x block resident
        grid = (gm, gn)
        x_map = lambda i, j: (i, 0)
        w_map = lambda i, j: (0, j)
        bn_map = lambda i, j: (0, j)
        o_map = lambda i, j: (i, j)
        c_map = lambda i, j: (0, 0)
    else:                             # inner axis = m tiles; weight block resident
        grid = (gn, gm)
        x_map = lambda j, i: (i, 0)
        w_map = lambda j, i: (0, j)
        bn_map = lambda j, i: (0, j)
        o_map = lambda j, i: (i, j)
        c_map = lambda j, i: (0, 0)

    in_specs = [pl.BlockSpec((tm, K), x_map)]
    inputs = [x]
    if ln is not None:
        gamma, beta = ln
        in_specs += [pl.BlockSpec((1, K), c_map), pl.BlockSpec((1, K), c_map)]
        inputs += [gamma.reshape(1, K), beta.reshape(1, K)]
    in_specs += [pl.BlockSpec((K, tn), w_map), pl.BlockSpec((1, tn), bn_map)]
    inputs += [w, b.reshape(1, N)]

    kernel = functools.partial(_fused_linear_kernel,
                               has_ln=ln is not None, activation=activation)
    return pl.pallas_call(
        kernel,
        out_shape=jax.ShapeDtypeStruct((M, N), out_dtype),
        grid=grid,
        in_specs=in_specs,
        out_specs=pl.BlockSpec((tm, tn), o_map),
        compiler_params=pltpu.CompilerParams(
            dimension_semantics=("parallel", "parallel"),
            vmem_limit_bytes=_VMEM_LIMIT),
    )(*inputs)


# ----------------------------------------------------------------------------
# Fused attention + output projection + residual
#   grid = (batch, q-tiles); heads looped in-kernel; per-head context written
#   to a bf16 VMEM concat buffer; single D-deep out-projection at the end.
#   1/sqrt(Dh) is pre-folded into the q weights (init_params).
# ----------------------------------------------------------------------------
def _attn_block_kernel(qkv_ref, hres_ref, wo_ref, bo_ref, o_ref, ctx_ref, *, heads):
    D = wo_ref.shape[0]
    Dh = D // heads
    tq = hres_ref.shape[1]
    q0 = pl.multiple_of(pl.program_id(1) * tq, tq)

    for h in range(heads):                         # static unroll over heads
        lo = h * Dh
        q = qkv_ref[0, pl.ds(q0, tq), lo:lo + Dh]              # (tq, Dh) bf16, pre-scaled
        k = qkv_ref[0, :, D + lo:D + lo + Dh]                  # (T, Dh)
        v = qkv_ref[0, :, 2 * D + lo:2 * D + lo + Dh]          # (T, Dh)
        s = jax.lax.dot_general(q, k, (((1,), (1,)), ((), ())),
                                preferred_element_type=jnp.float32)   # (tq, T)
        m = jnp.max(s, axis=-1, keepdims=True)
        p = jnp.exp(s - m)
        l = jnp.sum(p, axis=-1, keepdims=True)
        o = jnp.dot(p.astype(jnp.bfloat16), v,
                    preferred_element_type=jnp.float32)               # (tq, Dh)
        # Normalize AFTER the PV matmul (O(tq*Dh) instead of O(tq*T)).
        ctx_ref[:, lo:lo + Dh] = (o * pl.reciprocal(l, approx=True)).astype(jnp.bfloat16)

    # Single D-deep out-projection keeps the MXU contraction full.
    y = jnp.dot(ctx_ref[...], wo_ref[...], preferred_element_type=jnp.float32)
    y = y + bo_ref[...] + hres_ref[0].astype(jnp.float32)             # residual
    o_ref[0] = y.astype(o_ref.dtype)


def attention_block(qkv, h_res, wo, bo, *, heads):
    """qkv: (B, T, 3*D) bf16 (q pre-scaled), h_res: (B, T, D) f32 -> (B, T, D) f32."""
    B, T, threeD = qkv.shape
    D = threeD // 3
    tq = _q_tile(T)
    nq = T // tq
    return pl.pallas_call(
        functools.partial(_attn_block_kernel, heads=heads),
        out_shape=jax.ShapeDtypeStruct((B, T, D), jnp.float32),
        grid=(B, nq),
        in_specs=[
            pl.BlockSpec((1, T, threeD), lambda b, qi: (b, 0, 0)),   # resident per batch
            pl.BlockSpec((1, tq, D), lambda b, qi: (b, qi, 0)),
            pl.BlockSpec((D, D), lambda b, qi: (0, 0)),
            pl.BlockSpec((1, D), lambda b, qi: (0, 0)),
        ],
        out_specs=pl.BlockSpec((1, tq, D), lambda b, qi: (b, qi, 0)),
        scratch_shapes=[pltpu.VMEM((tq, D), jnp.bfloat16)],          # head concat buffer
        compiler_params=pltpu.CompilerParams(
            dimension_semantics=("parallel", "parallel"),
            vmem_limit_bytes=_VMEM_LIMIT),
    )(qkv, h_res, wo, bo.reshape(1, D))


# ----------------------------------------------------------------------------
# Fused MLP block: LN2 + FF1 + GELU + FF2 + residual, hidden dim H tiled as a
# reduction grid axis; LN output cached in VMEM; output block is the f32 acc.
# ----------------------------------------------------------------------------
def _mlp_block_kernel(x_ref, g_ref, lb_ref, w1_ref, b1_ref, w2_ref, b2_ref,
                      o_ref, xn_ref):
    @pl.when(pl.program_id(1) == 0)
    def _():
        x = x_ref[...].astype(jnp.float32)
        mu = jnp.mean(x, axis=-1, keepdims=True)
        var = jnp.mean(jnp.square(x - mu), axis=-1, keepdims=True)
        xn = (x - mu) * jax.lax.rsqrt(var + 1e-5) * g_ref[...] + lb_ref[...]
        xn_ref[...] = xn.astype(jnp.bfloat16)            # cached LN (computed once)
        o_ref[...] = x + b2_ref[...]                     # residual + b2 init

    f = jnp.dot(xn_ref[...], w1_ref[...],
                preferred_element_type=jnp.float32) + b1_ref[...]
    # TODO(synk): PyTorch nn.GELU defaults to exact erf; tanh approximation used.
    f = jax.nn.gelu(f, approximate=True)
    o_ref[...] += jnp.dot(f.astype(jnp.bfloat16), w2_ref[...],
                          preferred_element_type=jnp.float32)


def mlp_block(h, gamma, beta, w1, b1, w2, b2):
    M, D = h.shape
    H = w1.shape[1]
    tm = _pick_tile(M, _TM_TARGET, 8)
    tH = _pick_tile(H, _TH_TARGET, 128)
    if H % tH:                      # reduction axis must tile exactly
        tH = H
    grid = (pl.cdiv(M, tm), H // tH)
    return pl.pallas_call(
        _mlp_block_kernel,
        out_shape=jax.ShapeDtypeStruct((M, D), jnp.float32),
        grid=grid,
        in_specs=[
            pl.BlockSpec((tm, D), lambda i, j: (i, 0)),
            pl.BlockSpec((1, D), lambda i, j: (0, 0)),
            pl.BlockSpec((1, D), lambda i, j: (0, 0)),
            pl.BlockSpec((D, tH), lambda i, j: (0, j)),
            pl.BlockSpec((1, tH), lambda i, j: (0, j)),
            pl.BlockSpec((tH, D), lambda i, j: (j, 0)),
            pl.BlockSpec((1, D), lambda i, j: (0, 0)),
        ],
        out_specs=pl.BlockSpec((tm, D), lambda i, j: (i, 0)),   # resident accumulator
        scratch_shapes=[pltpu.VMEM((tm, D), jnp.bfloat16)],     # cached LN(x)
        compiler_params=pltpu.CompilerParams(
            dimension_semantics=("parallel", "arbitrary"),
            vmem_limit_bytes=_VMEM_LIMIT),
    )(h, gamma.reshape(1, D), beta.reshape(1, D),
      w1, b1.reshape(1, H), w2, b2.reshape(1, D))


# ----------------------------------------------------------------------------
# Parameter init (PyTorch-Linear-style uniform fan-in init; weights kept bf16
# for the MXU, biases / LayerNorm params in f32).
#   * attention scale folded into the q third of qkv_w / qkv_b
#   * output-projection N padded to a multiple of 128 (lane-dense stores)
# ----------------------------------------------------------------------------
def _linear_params(key, fan_in, fan_out):
    kw, kb = jax.random.split(key)
    bound = 1.0 / math.sqrt(fan_in)
    w = jax.random.uniform(kw, (fan_in, fan_out), jnp.float32, -bound, bound)
    b = jax.random.uniform(kb, (fan_out,), jnp.float32, -bound, bound)
    return w, b


def init_params(key, in_channels, sources, freq_bins, embed_dim, depth, heads):
    out_masks = sources * in_channels
    n_out = freq_bins * out_masks * 2
    n_out_pad = ((n_out + 127) // 128) * 128

    keys = jax.random.split(key, 2 + depth)
    params = {}

    in_w, in_b = _linear_params(keys[0], freq_bins * in_channels, embed_dim)
    params["in_w"], params["in_b"] = in_w.astype(jnp.bfloat16), in_b

    out_w, out_b = _linear_params(keys[1], embed_dim, n_out)
    if n_out_pad != n_out:
        out_w = jnp.pad(out_w, ((0, 0), (0, n_out_pad - n_out)))
        out_b = jnp.pad(out_b, (0, n_out_pad - n_out))
    params["out_w"], params["out_b"] = out_w.astype(jnp.bfloat16), out_b

    scale = 1.0 / math.sqrt(embed_dim // heads)
    qscale = jnp.concatenate([jnp.full((embed_dim,), scale, jnp.float32),
                              jnp.ones((2 * embed_dim,), jnp.float32)])

    blocks = []
    for d in range(depth):
        bk = jax.random.split(keys[2 + d], 4)
        blk = {}
        blk["ln1_g"] = jnp.ones((embed_dim,), jnp.float32)
        blk["ln1_b"] = jnp.zeros((embed_dim,), jnp.float32)
        qkv_w, qkv_b = _linear_params(bk[0], embed_dim, 3 * embed_dim)
        # Fold the 1/sqrt(Dh) softmax scale into q projection (zero runtime cost).
        blk["qkv_w"] = (qkv_w * qscale[None, :]).astype(jnp.bfloat16)
        blk["qkv_b"] = qkv_b * qscale
        ao_w, ao_b = _linear_params(bk[1], embed_dim, embed_dim)
        blk["ao_w"], blk["ao_b"] = ao_w.astype(jnp.bfloat16), ao_b
        blk["ln2_g"] = jnp.ones((embed_dim,), jnp.float32)
        blk["ln2_b"] = jnp.zeros((embed_dim,), jnp.float32)
        ff1_w, ff1_b = _linear_params(bk[2], embed_dim, 4 * embed_dim)
        ff2_w, ff2_b = _linear_params(bk[3], 4 * embed_dim, embed_dim)
        blk["ff1_w"], blk["ff1_b"] = ff1_w.astype(jnp.bfloat16), ff1_b
        blk["ff2_w"], blk["ff2_b"] = ff2_w.astype(jnp.bfloat16), ff2_b
        blocks.append(blk)
    params["blocks"] = blocks
    return params


# ----------------------------------------------------------------------------
# Forward pass
# ----------------------------------------------------------------------------
def transformer_block(h, p, B, T, heads):
    M, D = h.shape
    # Kernel 1: LN1 fused into the QKV projection (bf16 output for the MXU).
    qkv = fused_linear(h, p["qkv_w"], p["qkv_b"],
                       ln=(p["ln1_g"], p["ln1_b"]),
                       out_dtype=jnp.bfloat16)                    # (M, 3D)
    # Kernel 2: attention + single D-deep out-proj + residual.
    h = attention_block(qkv.reshape(B, T, 3 * D), h.reshape(B, T, D),
                        p["ao_w"], p["ao_b"], heads=heads).reshape(M, D)
    # Kernel 3: LN2 + FF1 + GELU + FF2 + residual, H tiled as a reduction axis.
    h = mlp_block(h, p["ln2_g"], p["ln2_b"],
                  p["ff1_w"], p["ff1_b"], p["ff2_w"], p["ff2_b"])
    return h


def neural_model_forward(params, x_stft_mag, x_audio, *, heads, sources):
    # x_audio is accepted but unused, matching the reference forward().
    del x_audio
    B, C, Fr, T = x_stft_mag.shape
    # (B, C, F, T) -> (B, T, C, F) -> (B*T, C*F)  [same as the torch permute/view]
    x = jnp.transpose(x_stft_mag, (0, 3, 1, 2)).reshape(B * T, C * Fr)
    h = fused_linear(x, params["in_w"], params["in_b"])
    for blk in params["blocks"]:
        h = transformer_block(h, blk, B, T, heads)
    # Output projection with fused sigmoid epilogue (lane-padded N for dense
    # stores; padding sliced off below).
    y = fused_linear(h, params["out_w"], params["out_b"], activation="sigmoid")
    out_masks2 = sources * C * 2
    y = y[:, :out_masks2 * Fr]
    y = y.reshape(B, T, out_masks2, Fr)
    y = jnp.transpose(y, (0, 2, 3, 1))                            # (B, out_masks*2, F, T)
    return y


# ----------------------------------------------------------------------------
if __name__ == "__main__":
    # Small, forward-consistent shapes (freq_bins=17 exercises the output-
    # projection lane-padding path: 17*4*2 = 136 -> padded to 256).
    B, in_channels, freq_bins, T = 2, 2, 17, 8
    sources, embed_dim, depth, heads = 2, 32, 2, 4

    key = jax.random.PRNGKey(0)
    k1, k2 = jax.random.split(key)
    x_stft_mag = jax.random.normal(k1, (B, in_channels, freq_bins, T), jnp.float32)
    x_audio = jax.random.normal(k2, (B, in_channels, 256), jnp.float32)  # unused

    params = init_params(jax.random.PRNGKey(42), in_channels, sources,
                         freq_bins, embed_dim, depth, heads)

    forward = jax.jit(functools.partial(neural_model_forward,
                                        heads=heads, sources=sources))
    out = jax.block_until_ready(forward(params, x_stft_mag, x_audio))

    expected_shape = (B, sources * in_channels * 2, freq_bins, T)
    assert out.shape == expected_shape, (out.shape, expected_shape)
    assert bool(jnp.all(jnp.isfinite(out)))
    assert bool(jnp.all((out >= 0.0) & (out <= 1.0)))   # sigmoid range
    print("KERNEL_OK")
</pallas_src>

<mosaic_0001>
module attributes {stable_mosaic.version = 11 : i64} {
  func.func @_fused_linear_kernel(%arg0: i32, %arg1: i32, %arg2: memref<16x34xf32, #tpu.memory_space<vmem>>, %arg3: memref<34x32xbf16, #tpu.memory_space<vmem>>, %arg4: memref<1x32xf32, #tpu.memory_space<vmem>>, %arg5: memref<16x32xf32, #tpu.memory_space<vmem>>) attributes {dimension_semantics = [#tpu.dimension_semantics<parallel>, #tpu.dimension_semantics<parallel>], iteration_bounds = array<i64: 1, 1>, scalar_prefetch = 0 : i64, scratch_operands = 0 : i64, tpu.core_type = #tpu.core_type<tc>, window_params = [{transform_indices = @transform_0, window_bounds = array<i64: 16, 34>}, {transform_indices = @transform_1, window_bounds = array<i64: 34, 32>}, {transform_indices = @transform_2, window_bounds = array<i64: 1, 32>}, {transform_indices = @transform_3, window_bounds = array<i64: 16, 32>}]} {
    %c0 = arith.constant 0 : index
    %c0_0 = arith.constant 0 : index
    %0 = vector.load %arg2[%c0, %c0_0] : memref<16x34xf32, #tpu.memory_space<vmem>>, vector<16x34xf32>
    %1 = arith.truncf %0 : vector<16x34xf32> to vector<16x34xbf16>
    %c0_1 = arith.constant 0 : index
    %c0_2 = arith.constant 0 : index
    %2 = vector.load %arg3[%c0_1, %c0_2] : memref<34x32xbf16, #tpu.memory_space<vmem>>, vector<34x32xbf16>
    %cst = arith.constant dense<0.000000e+00> : vector<16x32xf32>
    %3 = tpu.matmul %1, %2, %cst {dimension_numbers = #tpu.dot_dimension_numbers<[1], [0], [0], [1], [0, 0, 1, 1], [], []>} : vector<16x34xbf16>, vector<34x32xbf16>, vector<16x32xf32> -> vector<16x32xf32>
    %c0_3 = arith.constant 0 : index
    %c0_4 = arith.constant 0 : index
    %4 = vector.load %arg4[%c0_3, %c0_4] : memref<1x32xf32, #tpu.memory_space<vmem>>, vector<1x32xf32>
    %5 = vector.broadcast %4 : vector<1x32xf32> to vector<16x32xf32>
    %6 = arith.addf %3, %5 : vector<16x32xf32>
    %c0_5 = arith.constant 0 : index
    %c0_6 = arith.constant 0 : index
    %7 = vector.load %arg5[%c0_5, %c0_6] : memref<16x32xf32, #tpu.memory_space<vmem>>, vector<16x32xf32>
    tpu.vector_store %arg5[%c0_5, %c0_6], %6 {strides = array<i32>} : memref<16x32xf32, #tpu.memory_space<vmem>>, vector<16x32xf32>,
    return
  }
  func.func @transform_0(%arg0: i32, %arg1: i32) -> (i32, i32) {
    %c0_i32 = arith.constant 0 : i32
    %c0_i32_0 = arith.constant 0 : i32
    return %arg0, %c0_i32 : i32, i32
  }
  func.func @transform_1(%arg0: i32, %arg1: i32) -> (i32, i32) {
    %c0_i32 = arith.constant 0 : i32
    %c0_i32_0 = arith.constant 0 : i32
    return %c0_i32, %arg1 : i32, i32
  }
  func.func @transform_2(%arg0: i32, %arg1: i32) -> (i32, i32) {
    %c0_i32 = arith.constant 0 : i32
    %c0_i32_0 = arith.constant 0 : i32
    return %c0_i32, %arg1 : i32, i32
  }
  func.func @transform_3(%arg0: i32, %arg1: i32) -> (i32, i32) {
    %c0_i32 = arith.constant 0 : i32
    return %arg0, %arg1 : i32, i32
  }
}

module attributes {stable_mosaic.version = 11 : i64} {
  func.func @_attn_block_kernel(%arg0: i32, %arg1: i32, %arg2: memref<1x8x96xbf16, #tpu.memory_space<vmem>>, %arg3: memref<1x8x32xf32, #tpu.memory_space<vmem>>, %arg4: memref<32x32xbf16, #tpu.memory_space<vmem>>, %arg5: memref<1x32xf32, #tpu.memory_space<vmem>>, %arg6: memref<1x8x32xf32, #tpu.memory_space<vmem>>, %arg7: memref<8x32xbf16, #tpu.memory_space<vmem>>) attributes {dimension_semantics = [#tpu.dimension_semantics<parallel>, #tpu.dimension_semantics<parallel>], iteration_bounds = array<i64: 2, 1>, scalar_prefetch = 0 : i64, scratch_operands = 1 : i64, tpu.core_type = #tpu.core_type<tc>, window_params = [{transform_indices = @transform_0, window_bounds = array<i64: 1, 8, 96>}, {transform_indices = @transform_1, window_bounds = array<i64: 1, 8, 32>}, {pipeline_mode = #tpu.pipeline_mode<synchronous>, transform_indices = @transform_2, window_bounds = array<i64: 32, 32>}, {pipeline_mode = #tpu.pipeline_mode<synchronous>, transform_indices = @transform_3, window_bounds = array<i64: 1, 32>}, {transform_indices = @transform_4, window_bounds = array<i64: 1, 8, 32>}]} {
    %c8_i32 = arith.constant 8 : i32
    %0 = arith.muli %arg1, %c8_i32 : i32
    %1 = tpu.assume_multiple %0, 8 : i32
    %c0 = arith.constant 0 : index
    %2 = arith.index_cast %1 : i32 to index
    %c0_0 = arith.constant 0 : index
    %3 = vector.load %arg2[%c0, %2, %c0_0] : memref<1x8x96xbf16, #tpu.memory_space<vmem>>, vector<1x8x8xbf16>
    %4 = vector.shape_cast %3 : vector<1x8x8xbf16> to vector<8x8xbf16>
    %c0_1 = arith.constant 0 : index
    %c0_2 = arith.constant 0 : index
    %c32 = arith.constant 32 : index
    %5 = vector.load %arg2[%c0_1, %c0_2, %c32] : memref<1x8x96xbf16, #tpu.memory_space<vmem>>, vector<1x8x8xbf16>
    %6 = vector.shape_cast %5 : vector<1x8x8xbf16> to vector<8x8xbf16>
    %c0_3 = arith.constant 0 : index
    %c0_4 = arith.constant 0 : index
    %c64 = arith.constant 64 : index
    %7 = vector.load %arg2[%c0_3, %c0_4, %c64] : memref<1x8x96xbf16, #tpu.memory_space<vmem>>, vector<1x8x8xbf16>
    %8 = vector.shape_cast %7 : vector<1x8x8xbf16> to vector<8x8xbf16>
    %cst = arith.constant dense<0.000000e+00> : vector<8x8xf32>
    %9 = tpu.matmul %4, %6, %cst {dimension_numbers = #tpu.dot_dimension_numbers<[1], [1], [0], [0], [0, 0, 1, 0], [], []>} : vector<8x8xbf16>, vector<8x8xbf16>, vector<8x8xf32> -> vector<8x8xf32>
    %cst_5 = arith.constant dense<0xFF800000> : vector<8xf32>
    %10 = vector.multi_reduction <maximumf>, %9, %cst_5 [1] : vector<8x8xf32> to vector<8xf32>
    %11 = vector.shape_cast %10 : vector<8xf32> to vector<8x1xf32>
    %12 = vector.broadcast %11 : vector<8x1xf32> to vector<8x8xf32>
    %13 = arith.subf %9, %12 : vector<8x8xf32>
    %14 = math.exp %13 : vector<8x8xf32>
    %cst_6 = arith.constant dense<0.000000e+00> : vector<8xf32>
    %15 = vector.multi_reduction <add>, %14, %cst_6 [1] : vector<8x8xf32> to vector<8xf32>
    %16 = vector.shape_cast %15 : vector<8xf32> to vector<8x1xf32>
    %17 = arith.truncf %14 : vector<8x8xf32> to vector<8x8xbf16>
    %cst_7 = arith.constant dense<0.000000e+00> : vector<8x8xf32>
    %18 = tpu.matmul %17, %8, %cst_7 {dimension_numbers = #tpu.dot_dimension_numbers<[1], [0], [0], [1], [0, 0, 1, 1], [], []>} : vector<8x8xbf16>, vector<8x8xbf16>, vector<8x8xf32> -> vector<8x8xf32>
    %19 = tpu.reciprocal %16 {approx = true} : vector<8x1xf32> -> vector<8x1xf32>
    %20 = vector.broadcast %19 : vector<8x1xf32> to vector<8x8xf32>
    %21 = arith.mulf %18, %20 : vector<8x8xf32>
    %22 = arith.truncf %21 : vector<8x8xf32> to vector<8x8xbf16>
    %c0_8 = arith.constant 0 : index
    %c0_9 = arith.constant 0 : index
    %23 = vector.load %arg7[%c0_8, %c0_9] : memref<8x32xbf16, #tpu.memory_space<vmem>>, vector<8x8xbf16>
    tpu.vector_store %arg7[%c0_8, %c0_9], %22 {strides = array<i32>} : memref<8x32xbf16, #tpu.memory_space<vmem>>, vector<8x8xbf16>,
    %c0_10 = arith.constant 0 : index
    %24 = arith.index_cast %1 : i32 to index
    %c8 = arith.constant 8 : index
    %25 = vector.load %arg2[%c0_10, %24, %c8] : memref<1x8x96xbf16, #tpu.memory_space<vmem>>, vector<1x8x8xbf16>
    %26 = vector.shape_cast %25 : vector<1x8x8xbf16> to vector<8x8xbf16>
    %c0_11 = arith.constant 0 : index
    %c0_12 = arith.constant 0 : index
    %c40 = arith.constant 40 : index
    %27 = vector.load %arg2[%c0_11, %c0_12, %c40] : memref<1x8x96xbf16, #tpu.memory_space<vmem>>, vector<1x8x8xbf16>
    %28 = vector.shape_cast %27 : vector<1x8x8xbf16> to vector<8x8xbf16>
    %c0_13 = arith.constant 0 : index
    %c0_14 = arith.constant 0 : index
    %c72 = arith.constant 72 : index
    %29 = vector.load %arg2[%c0_13, %c0_14, %c72] : memref<1x8x96xbf16, #tpu.memory_space<vmem>>, vector<1x8x8xbf16>
    %30 = vector.shape_cast %29 : vector<1x8x8xbf16> to vector<8x8xbf16>
    %cst_15 = arith.constant dense<0.000000e+00> : vector<8x8xf32>
    %31 = tpu.matmul %26, %28, %cst_15 {dimension_numbers = #tpu.dot_dimension_numbers<[1], [1], [0], [0], [0, 0, 1, 0], [], []>} : vector<8x8xbf16>, vector<8x8xbf16>, vector<8x8xf32> -> vector<8x8xf32>
    %cst_16 = arith.constant dense<0xFF800000> : vector<8xf32>
    %32 = vector.multi_reduction <maximumf>, %31, %cst_16 [1] : vector<8x8xf32> to vector<8xf32>
    %33 = vector.shape_cast %32 : vector<8xf32> to vector<8x1xf32>
    %34 = vector.broadcast %33 : vector<8x1xf32> to vector<8x8xf32>
    %35 = arith.subf %31, %34 : vector<8x8xf32>
    %36 = math.exp %35 : vector<8x8xf32>
    %cst_17 = arith.constant dense<0.000000e+00> : vector<8xf32>
    %37 = vector.multi_reduction <add>, %36, %cst_17 [1] : vector<8x8xf32> to vector<8xf32>
    %38 = vector.shape_cast %37 : vector<8xf32> to vector<8x1xf32>
    %39 = arith.truncf %36 : vector<8x8xf32> to vector<8x8xbf16>
    %cst_18 = arith.constant dense<0.000000e+00> : vector<8x8xf32>
    %40 = tpu.matmul %39, %30, %cst_18 {dimension_numbers = #tpu.dot_dimension_numbers<[1], [0], [0], [1], [0, 0, 1, 1], [], []>} : vector<8x8xbf16>, vector<8x8xbf16>, vector<8x8xf32> -> vector<8x8xf32>
    %41 = tpu.reciprocal %38 {approx = true} : vector<8x1xf32> -> vector<8x1xf32>
    %42 = vector.broadcast %41 : vector<8x1xf32> to vector<8x8xf32>
    %43 = arith.mulf %40, %42 : vector<8x8xf32>
    %44 = arith.truncf %43 : vector<8x8xf32> to vector<8x8xbf16>
    %c0_19 = arith.constant 0 : index
    %c8_20 = arith.constant 8 : index
    %45 = vector.load %arg7[%c0_19, %c8_20] : memref<8x32xbf16, #tpu.memory_space<vmem>>, vector<8x8xbf16>
    tpu.vector_store %arg7[%c0_19, %c8_20], %44 {strides = array<i32>} : memref<8x32xbf16, #tpu.memory_space<vmem>>, vector<8x8xbf16>,
    %c0_21 = arith.constant 0 : index
    %46 = arith.index_cast %1 : i32 to index
    %c16 = arith.constant 16 : index
    %47 = vector.load %arg2[%c0_21, %46, %c16] : memref<1x8x96xbf16, #tpu.memory_space<vmem>>, vector<1x8x8xbf16>
    %48 = vector.shape_cast %47 : vector<1x8x8xbf16> to vector<8x8xbf16>
    %c0_22 = arith.constant 0 : index
    %c0_23 = arith.constant 0 : index
    %c48 = arith.constant 48 : index
    %49 = vector.load %arg2[%c0_22, %c0_23, %c48] : memref<1x8x96xbf16, #tpu.memory_space<vmem>>, vector<1x8x8xbf16>
    %50 = vector.shape_cast %49 : vector<1x8x8xbf16> to vector<8x8xbf16>
    %c0_24 = arith.constant 0 : index
    %c0_25 = arith.constant 0 : index
    %c80 = arith.constant 80 : index
    %51 = vector.load %arg2[%c0_24, %c0_25, %c80] : memref<1x8x96xbf16, #tpu.memory_space<vmem>>, vector<1x8x8xbf16>
    %52 = vector.shape_cast %51 : vector<1x8x8xbf16> to vector<8x8xbf16>
    %cst_26 = arith.constant dense<0.000000e+00> : vector<8x8xf32>
    %53 = tpu.matmul %48, %50, %cst_26 {dimension_numbers = #tpu.dot_dimension_numbers<[1], [1], [0], [0], [0, 0, 1, 0], [], []>} : vector<8x8xbf16>, vector<8x8xbf16>, vector<8x8xf32> -> vector<8x8xf32>
    %cst_27 = arith.constant dense<0xFF800000> : vector<8xf32>
    %54 = vector.multi_reduction <maximumf>, %53, %cst_27 [1] : vector<8x8xf32> to vector<8xf32>
    %55 = vector.shape_cast %54 : vector<8xf32> to vector<8x1xf32>
    %56 = vector.broadcast %55 : vector<8x1xf32> to vector<8x8xf32>
    %57 = arith.subf %53, %56 : vector<8x8xf32>
    %58 = math.exp %57 : vector<8x8xf32>
    %cst_28 = arith.constant dense<0.000000e+00> : vector<8xf32>
    %59 = vector.multi_reduction <add>, %58, %cst_28 [1] : vector<8x8xf32> to vector<8xf32>
    %60 = vector.shape_cast %59 : vector<8xf32> to vector<8x1xf32>
    %61 = arith.truncf %58 : vector<8x8xf32> to vector<8x8xbf16>
    %cst_29 = arith.constant dense<0.000000e+00> : vector<8x8xf32>
    %62 = tpu.matmul %61, %52, %cst_29 {dimension_numbers = #tpu.dot_dimension_numbers<[1], [0], [0], [1], [0, 0, 1, 1], [], []>} : vector<8x8xbf16>, vector<8x8xbf16>, vector<8x8xf32> -> vector<8x8xf32>
    %63 = tpu.reciprocal %60 {approx = true} : vector<8x1xf32> -> vector<8x1xf32>
    %64 = vector.broadcast %63 : vector<8x1xf32> to vector<8x8xf32>
    %65 = arith.mulf %62, %64 : vector<8x8xf32>
    %66 = arith.truncf %65 : vector<8x8xf32> to vector<8x8xbf16>
    %c0_30 = arith.constant 0 : index
    %c16_31 = arith.constant 16 : index
    %67 = vector.load %arg7[%c0_30, %c16_31] : memref<8x32xbf16, #tpu.memory_space<vmem>>, vector<8x8xbf16>
    tpu.vector_store %arg7[%c0_30, %c16_31], %66 {strides = array<i32>} : memref<8x32xbf16, #tpu.memory_space<vmem>>, vector<8x8xbf16>,
    %c0_32 = arith.constant 0 : index
    %68 = arith.index_cast %1 : i32 to index
    %c24 = arith.constant 24 : index
    %69 = vector.load %arg2[%c0_32, %68, %c24] : memref<1x8x96xbf16, #tpu.memory_space<vmem>>, vector<1x8x8xbf16>
    %70 = vector.shape_cast %69 : vector<1x8x8xbf16> to vector<8x8xbf16>
    %c0_33 = arith.constant 0 : index
    %c0_34 = arith.constant 0 : index
    %c56 = arith.constant 56 : index
    %71 = vector.load %arg2[%c0_33, %c0_34, %c56] : memref<1x8x96xbf16, #tpu.memory_space<vmem>>, vector<1x8x8xbf16>
    %72 = vector.shape_cast %71 : vector<1x8x8xbf16> to vector<8x8xbf16>
    %c0_35 = arith.constant 0 : index
    %c0_36 = arith.constant 0 : index
    %c88 = arith.constant 88 : index
    %73 = vector.load %arg2[%c0_35, %c0_36, %c88] : memref<1x8x96xbf16, #tpu.memory_space<vmem>>, vector<1x8x8xbf16>
    %74 = vector.shape_cast %73 : vector<1x8x8xbf16> to vector<8x8xbf16>
    %cst_37 = arith.constant dense<0.000000e+00> : vector<8x8xf32>
    %75 = tpu.matmul %70, %72, %cst_37 {dimension_numbers = #tpu.dot_dimension_numbers<[1], [1], [0], [0], [0, 0, 1, 0], [], []>} : vector<8x8xbf16>, vector<8x8xbf16>, vector<8x8xf32> -> vector<8x8xf32>
    %cst_38 = arith.constant dense<0xFF800000> : vector<8xf32>
    %76 = vector.multi_reduction <maximumf>, %75, %cst_38 [1] : vector<8x8xf32> to vector<8xf32>
    %77 = vector.shape_cast %76 : vector<8xf32> to vector<8x1xf32>
    %78 = vector.broadcast %77 : vector<8x1xf32> to vector<8x8xf32>
    %79 = arith.subf %75, %78 : vector<8x8xf32>
    %80 = math.exp %79 : vector<8x8xf32>
    %cst_39 = arith.constant dense<0.000000e+00> : vector<8xf32>
    %81 = vector.multi_reduction <add>, %80, %cst_39 [1] : vector<8x8xf32> to vector<8xf32>
    %82 = vector.shape_cast %81 : vector<8xf32> to vector<8x1xf32>
    %83 = arith.truncf %80 : vector<8x8xf32> to vector<8x8xbf16>
    %cst_40 = arith.constant dense<0.000000e+00> : vector<8x8xf32>
    %84 = tpu.matmul %83, %74, %cst_40 {dimension_numbers = #tpu.dot_dimension_numbers<[1], [0], [0], [1], [0, 0, 1, 1], [], []>} : vector<8x8xbf16>, vector<8x8xbf16>, vector<8x8xf32> -> vector<8x8xf32>
    %85 = tpu.reciprocal %82 {approx = true} : vector<8x1xf32> -> vector<8x1xf32>
    %86 = vector.broadcast %85 : vector<8x1xf32> to vector<8x8xf32>
    %87 = arith.mulf %84, %86 : vector<8x8xf32>
    %88 = arith.truncf %87 : vector<8x8xf32> to vector<8x8xbf16>
    %c0_41 = arith.constant 0 : index
    %c24_42 = arith.constant 24 : index
    %89 = vector.load %arg7[%c0_41, %c24_42] : memref<8x32xbf16, #tpu.memory_space<vmem>>, vector<8x8xbf16>
    tpu.vector_store %arg7[%c0_41, %c24_42], %88 {strides = array<i32>} : memref<8x32xbf16, #tpu.memory_space<vmem>>, vector<8x8xbf16>,
    %c0_43 = arith.constant 0 : index
    %c0_44 = arith.constant 0 : index
    %90 = vector.load %arg7[%c0_43, %c0_44] : memref<8x32xbf16, #tpu.memory_space<vmem>>, vector<8x32xbf16>
    %c0_45 = arith.constant 0 : index
    %c0_46 = arith.constant 0 : index
    %91 = vector.load %arg4[%c0_45, %c0_46] : memref<32x32xbf16, #tpu.memory_space<vmem>>, vector<32x32xbf16>
    %cst_47 = arith.constant dense<0.000000e+00> : vector<8x32xf32>
    %92 = tpu.matmul %90, %91, %cst_47 {dimension_numbers = #tpu.dot_dimension_numbers<[1], [0], [0], [1], [0, 0, 1, 1], [], []>} : vector<8x32xbf16>, vector<32x32xbf16>, vector<8x32xf32> -> vector<8x32xf32>
    %c0_48 = arith.constant 0 : index
    %c0_49 = arith.constant 0 : index
    %93 = vector.load %arg5[%c0_48, %c0_49] : memref<1x32xf32, #tpu.memory_space<vmem>>, vector<1x32xf32>
    %94 = vector.broadcast %93 : vector<1x32xf32> to vector<8x32xf32>
    %95 = arith.addf %92, %94 : vector<8x32xf32>
    %c0_50 = arith.constant 0 : index
    %c0_51 = arith.constant 0 : index
    %c0_52 = arith.constant 0 : index
    %96 = vector.load %arg3[%c0_50, %c0_51, %c0_52] : memref<1x8x32xf32, #tpu.memory_space<vmem>>, vector<1x8x32xf32>
    %97 = vector.shape_cast %96 : vector<1x8x32xf32> to vector<8x32xf32>
    %98 = arith.addf %95, %97 : vector<8x32xf32>
    %c0_53 = arith.constant 0 : index
    %c0_54 = arith.constant 0 : index
    %c0_55 = arith.constant 0 : index
    %99 = vector.load %arg6[%c0_53, %c0_54, %c0_55] : memref<1x8x32xf32, #tpu.memory_space<vmem>>, vector<1x8x32xf32>
    %100 = vector.shape_cast %99 : vector<1x8x32xf32> to vector<8x32xf32>
    %101 = vector.shape_cast %98 : vector<8x32xf32> to vector<1x8x32xf32>
    tpu.vector_store %arg6[%c0_53, %c0_54, %c0_55], %101 {strides = array<i32>} : memref<1x8x32xf32, #tpu.memory_space<vmem>>, vector<1x8x32xf32>,
    return
  }
  func.func @transform_0(%arg0: i32, %arg1: i32) -> (i32, i32, i32) {
    %c0_i32 = arith.constant 0 : i32
    %c0_i32_0 = arith.constant 0 : i32
    %c0_i32_1 = arith.constant 0 : i32
    return %arg0, %c0_i32, %c0_i32_0 : i32, i32, i32
  }
  func.func @transform_1(%arg0: i32, %arg1: i32) -> (i32, i32, i32) {
    %c0_i32 = arith.constant 0 : i32
    %c0_i32_0 = arith.constant 0 : i32
    return %arg0, %arg1, %c0_i32 : i32, i32, i32
  }
  func.func @transform_2(%arg0: i32, %arg1: i32) -> (i32, i32) {
    %c0_i32 = arith.constant 0 : i32
    %c0_i32_0 = arith.constant 0 : i32
    %c0_i32_1 = arith.constant 0 : i32
    return %c0_i32, %c0_i32_0 : i32, i32
  }
  func.func @transform_3(%arg0: i32, %arg1: i32) -> (i32, i32) {
    %c0_i32 = arith.constant 0 : i32
    %c0_i32_0 = arith.constant 0 : i32
    %c0_i32_1 = arith.constant 0 : i32
    return %c0_i32, %c0_i32_0 : i32, i32
  }
  func.func @transform_4(%arg0: i32, %arg1: i32) -> (i32, i32, i32) {
    %c0_i32 = arith.constant 0 : i32
    %c0_i32_0 = arith.constant 0 : i32
    return %arg0, %arg1, %c0_i32 : i32, i32, i32
  }
}

module attributes {stable_mosaic.version = 11 : i64} {
  func.func @_fused_linear_kernel(%arg0: i32, %arg1: i32, %arg2: memref<16x32xf32, #tpu.memory_space<vmem>>, %arg3: memref<1x32xf32, #tpu.memory_space<vmem>>, %arg4: memref<1x32xf32, #tpu.memory_space<vmem>>, %arg5: memref<32x96xbf16, #tpu.memory_space<vmem>>, %arg6: memref<1x96xf32, #tpu.memory_space<vmem>>, %arg7: memref<16x96xbf16, #tpu.memory_space<vmem>>) attributes {dimension_semantics = [#tpu.dimension_semantics<parallel>, #tpu.dimension_semantics<parallel>], iteration_bounds = array<i64: 1, 1>, scalar_prefetch = 0 : i64, scratch_operands = 0 : i64, tpu.core_type = #tpu.core_type<tc>, window_params = [{transform_indices = @transform_0, window_bounds = array<i64: 16, 32>}, {pipeline_mode = #tpu.pipeline_mode<synchronous>, transform_indices = @transform_1, window_bounds = array<i64: 1, 32>}, {pipeline_mode = #tpu.pipeline_mode<synchronous>, transform_indices = @transform_2, window_bounds = array<i64: 1, 32>}, {transform_indices = @transform_3, window_bounds = array<i64: 32, 96>}, {transform_indices = @transform_4, window_bounds = array<i64: 1, 96>}, {transform_indices = @transform_5, window_bounds = array<i64: 16, 96>}]} {
    %c0 = arith.constant 0 : index
    %c0_0 = arith.constant 0 : index
    %0 = vector.load %arg2[%c0, %c0_0] : memref<16x32xf32, #tpu.memory_space<vmem>>, vector<16x32xf32>
    %cst = arith.constant dense<0.000000e+00> : vector<16xf32>
    %1 = vector.multi_reduction <add>, %0, %cst [1] : vector<16x32xf32> to vector<16xf32>
    %2 = vector.shape_cast %1 : vector<16xf32> to vector<16x1xf32>
    %cst_1 = arith.constant 3.200000e+01 : f32
    %3 = vector.broadcast %cst_1 : f32 to vector<16x1xf32>
    %4 = arith.divf %2, %3 : vector<16x1xf32>
    %5 = vector.broadcast %4 : vector<16x1xf32> to vector<16x32xf32>
    %6 = arith.subf %0, %5 : vector<16x32xf32>
    %7 = arith.mulf %6, %6 : vector<16x32xf32>
    %cst_2 = arith.constant dense<0.000000e+00> : vector<16xf32>
    %8 = vector.multi_reduction <add>, %7, %cst_2 [1] : vector<16x32xf32> to vector<16xf32>
    %9 = vector.shape_cast %8 : vector<16xf32> to vector<16x1xf32>
    %cst_3 = arith.constant 3.200000e+01 : f32
    %10 = vector.broadcast %cst_3 : f32 to vector<16x1xf32>
    %11 = arith.divf %9, %10 : vector<16x1xf32>
    %12 = vector.broadcast %4 : vector<16x1xf32> to vector<16x32xf32>
    %13 = arith.subf %0, %12 : vector<16x32xf32>
    %cst_4 = arith.constant 9.99999974E-6 : f32
    %14 = vector.broadcast %cst_4 : f32 to vector<16x1xf32>
    %15 = arith.addf %11, %14 : vector<16x1xf32>
    %16 = math.rsqrt %15 : vector<16x1xf32>
    %17 = vector.broadcast %16 : vector<16x1xf32> to vector<16x32xf32>
    %18 = arith.mulf %13, %17 : vector<16x32xf32>
    %c0_5 = arith.constant 0 : index
    %c0_6 = arith.constant 0 : index
    %19 = vector.load %arg3[%c0_5, %c0_6] : memref<1x32xf32, #tpu.memory_space<vmem>>, vector<1x32xf32>
    %20 = vector.broadcast %19 : vector<1x32xf32> to vector<16x32xf32>
    %21 = arith.mulf %18, %20 : vector<16x32xf32>
    %c0_7 = arith.constant 0 : index
    %c0_8 = arith.constant 0 : index
    %22 = vector.load %arg4[%c0_7, %c0_8] : memref<1x32xf32, #tpu.memory_space<vmem>>, vector<1x32xf32>
    %23 = vector.broadcast %22 : vector<1x32xf32> to vector<16x32xf32>
    %24 = arith.addf %21, %23 : vector<16x32xf32>
    %25 = arith.truncf %24 : vector<16x32xf32> to vector<16x32xbf16>
    %c0_9 = arith.constant 0 : index
    %c0_10 = arith.constant 0 : index
    %26 = vector.load %arg5[%c0_9, %c0_10] : memref<32x96xbf16, #tpu.memory_space<vmem>>, vector<32x96xbf16>
    %cst_11 = arith.constant dense<0.000000e+00> : vector<16x96xf32>
    %27 = tpu.matmul %25, %26, %cst_11 {dimension_numbers = #tpu.dot_dimension_numbers<[1], [0], [0], [1], [0, 0, 1, 1], [], []>} : vector<16x32xbf16>, vector<32x96xbf16>, vector<16x96xf32> -> vector<16x96xf32>
    %c0_12 = arith.constant 0 : index
    %c0_13 = arith.constant 0 : index
    %28 = vector.load %arg6[%c0_12, %c0_13] : memref<1x96xf32, #tpu.memory_space<vmem>>, vector<1x96xf32>
    %29 = vector.broadcast %28 : vector<1x96xf32> to vector<16x96xf32>
    %30 = arith.addf %27, %29 : vector<16x96xf32>
    %31 = arith.truncf %30 : vector<16x96xf32> to vector<16x96xbf16>
    %c0_14 = arith.constant 0 : index
    %c0_15 = arith.constant 0 : index
    %32 = vector.load %arg7[%c0_14, %c0_15] : memref<16x96xbf16, #tpu.memory_space<vmem>>, vector<16x96xbf16>
    tpu.vector_store %arg7[%c0_14, %c0_15], %31 {strides = array<i32>} : memref<16x96xbf16, #tpu.memory_space<vmem>>, vector<16x96xbf16>,
    return
  }
  func.func @transform_0(%arg0: i32, %arg1: i32) -> (i32, i32) {
    %c0_i32 = arith.constant 0 : i32
    %c0_i32_0 = arith.constant 0 : i32
    return %arg0, %c0_i32 : i32, i32
  }
  func.func @transform_1(%arg0: i32, %arg1: i32) -> (i32, i32) {
    %c0_i32 = arith.constant 0 : i32
    %c0_i32_0 = arith.constant 0 : i32
    %c0_i32_1 = arith.constant 0 : i32
    return %c0_i32, %c0_i32_0 : i32, i32
  }
  func.func @transform_2(%arg0: i32, %arg1: i32) -> (i32, i32) {
    %c0_i32 = arith.constant 0 : i32
    %c0_i32_0 = arith.constant 0 : i32
    %c0_i32_1 = arith.constant 0 : i32
    return %c0_i32, %c0_i32_0 : i32, i32
  }
  func.func @transform_3(%arg0: i32, %arg1: i32) -> (i32, i32) {
    %c0_i32 = arith.constant 0 : i32
    %c0_i32_0 = arith.constant 0 : i32
    return %c0_i32, %arg1 : i32, i32
  }
  func.func @transform_4(%arg0: i32, %arg1: i32) -> (i32, i32) {
    %c0_i32 = arith.constant 0 : i32
    %c0_i32_0 = arith.constant 0 : i32
    return %c0_i32, %arg1 : i32, i32
  }
  func.func @transform_5(%arg0: i32, %arg1: i32) -> (i32, i32) {
    %c0_i32 = arith.constant 0 : i32
    return %arg0, %arg1 : i32, i32
  }
}

module attributes {stable_mosaic.version = 11 : i64} {
  func.func @_mlp_block_kernel(%arg0: i32, %arg1: i32, %arg2: memref<16x32xf32, #tpu.memory_space<vmem>>, %arg3: memref<1x32xf32, #tpu.memory_space<vmem>>, %arg4: memref<1x32xf32, #tpu.memory_space<vmem>>, %arg5: memref<32x128xbf16, #tpu.memory_space<vmem>>, %arg6: memref<1x128xf32, #tpu.memory_space<vmem>>, %arg7: memref<128x32xbf16, #tpu.memory_space<vmem>>, %arg8: memref<1x32xf32, #tpu.memory_space<vmem>>, %arg9: memref<16x32xf32, #tpu.memory_space<vmem>>, %arg10: memref<16x32xbf16, #tpu.memory_space<vmem>>) attributes {dimension_semantics = [#tpu.dimension_semantics<parallel>, #tpu.dimension_semantics<arbitrary>], iteration_bounds = array<i64: 1, 1>, scalar_prefetch = 0 : i64, scratch_operands = 1 : i64, tpu.core_type = #tpu.core_type<tc>, window_params = [{transform_indices = @transform_0, window_bounds = array<i64: 16, 32>}, {pipeline_mode = #tpu.pipeline_mode<synchronous>, transform_indices = @transform_1, window_bounds = array<i64: 1, 32>}, {pipeline_mode = #tpu.pipeline_mode<synchronous>, transform_indices = @transform_2, window_bounds = array<i64: 1, 32>}, {transform_indices = @transform_3, window_bounds = array<i64: 32, 128>}, {transform_indices = @transform_4, window_bounds = array<i64: 1, 128>}, {transform_indices = @transform_5, window_bounds = array<i64: 128, 32>}, {pipeline_mode = #tpu.pipeline_mode<synchronous>, transform_indices = @transform_6, window_bounds = array<i64: 1, 32>}, {transform_indices = @transform_7, window_bounds = array<i64: 16, 32>}]} {
    %c0_i32 = arith.constant 0 : i32
    %0 = arith.cmpi eq, %arg1, %c0_i32 : i32
    %1 = arith.extui %0 : i1 to i32
    %c0_i32_0 = arith.constant 0 : i32
    %2 = arith.cmpi ne, %1, %c0_i32_0 : i32
    scf.if %2 {
      %c0_17 = arith.constant 0 : index
      %c0_18 = arith.constant 0 : index
      %28 = vector.load %arg2[%c0_17, %c0_18] : memref<16x32xf32, #tpu.memory_space<vmem>>, vector<16x32xf32>
      %cst_19 = arith.constant dense<0.000000e+00> : vector<16xf32>
      %29 = vector.multi_reduction <add>, %28, %cst_19 [1] : vector<16x32xf32> to vector<16xf32>
      %30 = vector.shape_cast %29 : vector<16xf32> to vector<16x1xf32>
      %cst_20 = arith.constant 3.200000e+01 : f32
      %31 = vector.broadcast %cst_20 : f32 to vector<16x1xf32>
      %32 = arith.divf %30, %31 : vector<16x1xf32>
      %33 = vector.broadcast %32 : vector<16x1xf32> to vector<16x32xf32>
      %34 = arith.subf %28, %33 : vector<16x32xf32>
      %35 = arith.mulf %34, %34 : vector<16x32xf32>
      %cst_21 = arith.constant dense<0.000000e+00> : vector<16xf32>
      %36 = vector.multi_reduction <add>, %35, %cst_21 [1] : vector<16x32xf32> to vector<16xf32>
      %37 = vector.shape_cast %36 : vector<16xf32> to vector<16x1xf32>
      %cst_22 = arith.constant 3.200000e+01 : f32
      %38 = vector.broadcast %cst_22 : f32 to vector<16x1xf32>
      %39 = arith.divf %37, %38 : vector<16x1xf32>
      %40 = vector.broadcast %32 : vector<16x1xf32> to vector<16x32xf32>
      %41 = arith.subf %28, %40 : vector<16x32xf32>
      %cst_23 = arith.constant 9.99999974E-6 : f32
      %42 = vector.broadcast %cst_23 : f32 to vector<16x1xf32>
      %43 = arith.addf %39, %42 : vector<16x1xf32>
      %44 = math.rsqrt %43 : vector<16x1xf32>
      %45 = vector.broadcast %44 : vector<16x1xf32> to vector<16x32xf32>
      %46 = arith.mulf %41, %45 : vector<16x32xf32>
      %c0_24 = arith.constant 0 : index
      %c0_25 = arith.constant 0 : index
      %47 = vector.load %arg3[%c0_24, %c0_25] : memref<1x32xf32, #tpu.memory_space<vmem>>, vector<1x32xf32>
      %48 = vector.broadcast %47 : vector<1x32xf32> to vector<16x32xf32>
      %49 = arith.mulf %46, %48 : vector<16x32xf32>
      %c0_26 = arith.constant 0 : index
      %c0_27 = arith.constant 0 : index
      %50 = vector.load %arg4[%c0_26, %c0_27] : memref<1x32xf32, #tpu.memory_space<vmem>>, vector<1x32xf32>
      %51 = vector.broadcast %50 : vector<1x32xf32> to vector<16x32xf32>
      %52 = arith.addf %49, %51 : vector<16x32xf32>
      %53 = arith.truncf %52 : vector<16x32xf32> to vector<16x32xbf16>
      %c0_28 = arith.constant 0 : index
      %c0_29 = arith.constant 0 : index
      %54 = vector.load %arg10[%c0_28, %c0_29] : memref<16x32xbf16, #tpu.memory_space<vmem>>, vector<16x32xbf16>
      tpu.vector_store %arg10[%c0_28, %c0_29], %53 {strides = array<i32>} : memref<16x32xbf16, #tpu.memory_space<vmem>>, vector<16x32xbf16>,
      %c0_30 = arith.constant 0 : index
      %c0_31 = arith.constant 0 : index
      %55 = vector.load %arg8[%c0_30, %c0_31] : memref<1x32xf32, #tpu.memory_space<vmem>>, vector<1x32xf32>
      %56 = vector.broadcast %55 : vector<1x32xf32> to vector<16x32xf32>
      %57 = arith.addf %28, %56 : vector<16x32xf32>
      %c0_32 = arith.constant 0 : index
      %c0_33 = arith.constant 0 : index
      %58 = vector.load %arg9[%c0_32, %c0_33] : memref<16x32xf32, #tpu.memory_space<vmem>>, vector<16x32xf32>
      tpu.vector_store %arg9[%c0_32, %c0_33], %57 {strides = array<i32>} : memref<16x32xf32, #tpu.memory_space<vmem>>, vector<16x32xf32>,
    } else {
    }
    %c0 = arith.constant 0 : index
    %c0_1 = arith.constant 0 : index
    %3 = vector.load %arg10[%c0, %c0_1] : memref<16x32xbf16, #tpu.memory_space<vmem>>, vector<16x32xbf16>
    %c0_2 = arith.constant 0 : index
    %c0_3 = arith.constant 0 : index
    %4 = vector.load %arg5[%c0_2, %c0_3] : memref<32x128xbf16, #tpu.memory_space<vmem>>, vector<32x128xbf16>
    %cst = arith.constant dense<0.000000e+00> : vector<16x128xf32>
    %5 = tpu.matmul %3, %4, %cst {dimension_numbers = #tpu.dot_dimension_numbers<[1], [0], [0], [1], [0, 0, 1, 1], [], []>} : vector<16x32xbf16>, vector<32x128xbf16>, vector<16x128xf32> -> vector<16x128xf32>
    %c0_4 = arith.constant 0 : index
    %c0_5 = arith.constant 0 : index
    %6 = vector.load %arg6[%c0_4, %c0_5] : memref<1x128xf32, #tpu.memory_space<vmem>>, vector<1x128xf32>
    %7 = vector.broadcast %6 : vector<1x128xf32> to vector<16x128xf32>
    %8 = arith.addf %5, %7 : vector<16x128xf32>
    %9 = arith.mulf %8, %8 : vector<16x128xf32>
    %10 = arith.mulf %8, %9 : vector<16x128xf32>
    %cst_6 = arith.constant 4.471500e-02 : f32
    %11 = vector.broadcast %cst_6 : f32 to vector<16x128xf32>
    %12 = arith.mulf %11, %10 : vector<16x128xf32>
    %13 = arith.addf %8, %12 : vector<16x128xf32>
    %cst_7 = arith.constant 0.797884583 : f32
    %14 = vector.broadcast %cst_7 : f32 to vector<16x128xf32>
    %15 = arith.mulf %14, %13 : vector<16x128xf32>
    %16 = math.tanh %15 : vector<16x128xf32>
    %cst_8 = arith.constant 1.000000e+00 : f32
    %17 = vector.broadcast %cst_8 : f32 to vector<16x128xf32>
    %18 = arith.addf %17, %16 : vector<16x128xf32>
    %cst_9 = arith.constant 5.000000e-01 : f32
    %19 = vector.broadcast %cst_9 : f32 to vector<16x128xf32>
    %20 = arith.mulf %19, %18 : vector<16x128xf32>
    %21 = arith.mulf %8, %20 : vector<16x128xf32>
    %c0_10 = arith.constant 0 : index
    %c0_11 = arith.constant 0 : index
    %22 = vector.load %arg9[%c0_10, %c0_11] : memref<16x32xf32, #tpu.memory_space<vmem>>, vector<16x32xf32>
    %23 = arith.truncf %21 : vector<16x128xf32> to vector<16x128xbf16>
    %c0_12 = arith.constant 0 : index
    %c0_13 = arith.constant 0 : index
    %24 = vector.load %arg7[%c0_12, %c0_13] : memref<128x32xbf16, #tpu.memory_space<vmem>>, vector<128x32xbf16>
    %cst_14 = arith.constant dense<0.000000e+00> : vector<16x32xf32>
    %25 = tpu.matmul %23, %24, %cst_14 {dimension_numbers = #tpu.dot_dimension_numbers<[1], [0], [0], [1], [0, 0, 1, 1], [], []>} : vector<16x128xbf16>, vector<128x32xbf16>, vector<16x32xf32> -> vector<16x32xf32>
    %26 = arith.addf %22, %25 : vector<16x32xf32>
    %c0_15 = arith.constant 0 : index
    %c0_16 = arith.constant 0 : index
    %27 = vector.load %arg9[%c0_15, %c0_16] : memref<16x32xf32, #tpu.memory_space<vmem>>, vector<16x32xf32>
    tpu.vector_store %arg9[%c0_15, %c0_16], %26 {strides = array<i32>} : memref<16x32xf32, #tpu.memory_space<vmem>>, vector<16x32xf32>,
    return
  }
  func.func @transform_0(%arg0: i32, %arg1: i32) -> (i32, i32) {
    %c0_i32 = arith.constant 0 : i32
    %c0_i32_0 = arith.constant 0 : i32
    return %arg0, %c0_i32 : i32, i32
  }
  func.func @transform_1(%arg0: i32, %arg1: i32) -> (i32, i32) {
    %c0_i32 = arith.constant 0 : i32
    %c0_i32_0 = arith.constant 0 : i32
    %c0_i32_1 = arith.constant 0 : i32
    return %c0_i32, %c0_i32_0 : i32, i32
  }
  func.func @transform_2(%arg0: i32, %arg1: i32) -> (i32, i32) {
    %c0_i32 = arith.constant 0 : i32
    %c0_i32_0 = arith.constant 0 : i32
    %c0_i32_1 = arith.constant 0 : i32
    return %c0_i32, %c0_i32_0 : i32, i32
  }
  func.func @transform_3(%arg0: i32, %arg1: i32) -> (i32, i32) {
    %c0_i32 = arith.constant 0 : i32
    %c0_i32_0 = arith.constant 0 : i32
    return %c0_i32, %arg1 : i32, i32
  }
  func.func @transform_4(%arg0: i32, %arg1: i32) -> (i32, i32) {
    %c0_i32 = arith.constant 0 : i32
    %c0_i32_0 = arith.constant 0 : i32
    return %c0_i32, %arg1 : i32, i32
  }
  func.func @transform_5(%arg0: i32, %arg1: i32) -> (i32, i32) {
    %c0_i32 = arith.constant 0 : i32
    %c0_i32_0 = arith.constant 0 : i32
    return %arg1, %c0_i32 : i32, i32
  }
  func.func @transform_6(%arg0: i32, %arg1: i32) -> (i32, i32) {
    %c0_i32 = arith.constant 0 : i32
    %c0_i32_0 = arith.constant 0 : i32
    %c0_i32_1 = arith.constant 0 : i32
    return %c0_i32, %c0_i32_0 : i32, i32
  }
  func.func @transform_7(%arg0: i32, %arg1: i32) -> (i32, i32) {
    %c0_i32 = arith.constant 0 : i32
    %c0_i32_0 = arith.constant 0 : i32
    return %arg0, %c0_i32 : i32, i32
  }
}

module attributes {stable_mosaic.version = 11 : i64} {
  func.func @_fused_linear_kernel(%arg0: i32, %arg1: i32, %arg2: memref<16x32xf32, #tpu.memory_space<vmem>>, %arg3: memref<32x256xbf16, #tpu.memory_space<vmem>>, %arg4: memref<1x256xf32, #tpu.memory_space<vmem>>, %arg5: memref<16x256xf32, #tpu.memory_space<vmem>>) attributes {dimension_semantics = [#tpu.dimension_semantics<parallel>, #tpu.dimension_semantics<parallel>], iteration_bounds = array<i64: 1, 1>, scalar_prefetch = 0 : i64, scratch_operands = 0 : i64, tpu.core_type = #tpu.core_type<tc>, window_params = [{transform_indices = @transform_0, window_bounds = array<i64: 16, 32>}, {transform_indices = @transform_1, window_bounds = array<i64: 32, 256>}, {transform_indices = @transform_2, window_bounds = array<i64: 1, 256>}, {transform_indices = @transform_3, window_bounds = array<i64: 16, 256>}]} {
    %c0 = arith.constant 0 : index
    %c0_0 = arith.constant 0 : index
    %0 = vector.load %arg2[%c0, %c0_0] : memref<16x32xf32, #tpu.memory_space<vmem>>, vector<16x32xf32>
    %1 = arith.truncf %0 : vector<16x32xf32> to vector<16x32xbf16>
    %c0_1 = arith.constant 0 : index
    %c0_2 = arith.constant 0 : index
    %2 = vector.load %arg3[%c0_1, %c0_2] : memref<32x256xbf16, #tpu.memory_space<vmem>>, vector<32x256xbf16>
    %cst = arith.constant dense<0.000000e+00> : vector<16x256xf32>
    %3 = tpu.matmul %1, %2, %cst {dimension_numbers = #tpu.dot_dimension_numbers<[1], [0], [0], [1], [0, 0, 1, 1], [], []>} : vector<16x32xbf16>, vector<32x256xbf16>, vector<16x256xf32> -> vector<16x256xf32>
    %c0_3 = arith.constant 0 : index
    %c0_4 = arith.constant 0 : index
    %4 = vector.load %arg4[%c0_3, %c0_4] : memref<1x256xf32, #tpu.memory_space<vmem>>, vector<1x256xf32>
    %5 = vector.broadcast %4 : vector<1x256xf32> to vector<16x256xf32>
    %6 = arith.addf %3, %5 : vector<16x256xf32>
    %7 = arith.negf %6 : vector<16x256xf32>
    %8 = math.exp %7 : vector<16x256xf32>
    %cst_5 = arith.constant 1.000000e+00 : f32
    %9 = vector.broadcast %cst_5 : f32 to vector<16x256xf32>
    %10 = arith.addf %9, %8 : vector<16x256xf32>
    %11 = arith.divf %9, %10 : vector<16x256xf32>
    %c0_6 = arith.constant 0 : index
    %c0_7 = arith.constant 0 : index
    %12 = vector.load %arg5[%c0_6, %c0_7] : memref<16x256xf32, #tpu.memory_space<vmem>>, vector<16x256xf32>
    tpu.vector_store %arg5[%c0_6, %c0_7], %11 {strides = array<i32>} : memref<16x256xf32, #tpu.memory_space<vmem>>, vector<16x256xf32>,
    return
  }
  func.func @transform_0(%arg0: i32, %arg1: i32) -> (i32, i32) {
    %c0_i32 = arith.constant 0 : i32
    %c0_i32_0 = arith.constant 0 : i32
    return %arg0, %c0_i32 : i32, i32
  }
  func.func @transform_1(%arg0: i32, %arg1: i32) -> (i32, i32) {
    %c0_i32 = arith.constant 0 : i32
    %c0_i32_0 = arith.constant 0 : i32
    return %c0_i32, %arg1 : i32, i32
  }
  func.func @transform_2(%arg0: i32, %arg1: i32) -> (i32, i32) {
    %c0_i32 = arith.constant 0 : i32
    %c0_i32_0 = arith.constant 0 : i32
    return %c0_i32, %arg1 : i32, i32
  }
  func.func @transform_3(%arg0: i32, %arg1: i32) -> (i32, i32) {
    %c0_i32 = arith.constant 0 : i32
    return %arg0, %arg1 : i32, i32
  }
}

</mosaic_0001>

<llo_original>
// kernel: neural_model_forward.8
$region0: #{neural_model_forward.8}
  #allocation0 [shape = 'u32[]', space=smem, size = 0x4, offset = 0x4, fixed_abs, tag = 'smem constant byte address 0x4 - core index']
  #allocation1 [shape = 'u32[144,128]{1,0:T(1,128)}', space=vmem, size = 0x12000, scoped, tag = 'internal scratch']
  %s0 = inlined_call_operand.vmem [shape: f32[16,34], index: 0, kind: input, shape index: {}]
  %s1 = inlined_call_operand.vmem [shape: bf16[34,32], index: 1, kind: input, shape index: {}]
  %s2 = inlined_call_operand.vmem [shape: f32[1,32], index: 2, kind: input, shape index: {}]
  %s3 = inlined_call_operand.vmem [shape: f32[16,32], index: 3, kind: output, shape index: {}]
  %s4 = sld [smem:[#allocation0]]
  $region22: #{neural_model_forward.8} parent=0
    _
  %s6 = ssub.s32 1, %s4
  %s7 = scalar_select 0, %s6, %s4
  // Predicated region
  $region2: #{neural_model_forward.8} parent=0 // pred_check
    _
  $region3: #{neural_model_forward.8} parent=0 // pred_check_branch
    %9 = sbr.rel (0) target = $region5
  $region4: #{neural_model_forward.8} parent=0 // pred_region
    _
  $region5: #{neural_model_forward.8} parent=0 // pred_fallthru
    _
  // Predicated region
  $region6: #{neural_model_forward.8} parent=0 // pred_check
    _
  $region7: #{neural_model_forward.8} parent=0 // pred_check_branch
    %11 = sbr.rel (0) target = $region9
  $region8: #{neural_model_forward.8} parent=0 // pred_region
    _
  $region9: #{neural_model_forward.8} parent=0 // pred_fallthru
    _
  // Predicated region
  $region10: #{neural_model_forward.8} parent=0 // pred_check
    _
  $region11: #{neural_model_forward.8} parent=0 // pred_check_branch
    %13 = sbr.rel (0) target = $region13
  $region12: #{neural_model_forward.8} parent=0 // pred_region
    _
  $region13: #{neural_model_forward.8} parent=0 // pred_fallthru
    _
  %v15 = vld [vmem:[%s0] sm:$0xff]
  %v16 = vld [vmem:[%s0 + $0x8] sm:$0xff]
  %v17 = vpack.c.bf16 %v16, %v15
  %v18 = vld [vmem:[%s1] sm:$0xf]
  %v19 = vld [vmem:[%s1 + $0x4] sm:$0xf]
  %v20 = vld [vmem:[%s1 + $0x8] sm:$0xf]
  %v21 = vld [vmem:[%s1 + $0xc] sm:$0xf]
  %v22 = vld [vmem:[%s1 + $0x10] sm:$0x1]
  %v23 = vld [vmem:[%s2] sm:$0x1]
  %v25 = vlaneseq
  %v26 = vshrl.u32 %v25, 7
  %v27 = vsub.s32 0, %v26
  %v28 = vrot.slane %v23, %v27
  %v35 = vunpack.c.l.b16 %v18
  %v36 = vunpack.c.l.b16 %v19
  %v37 = vunpack.c.l.b16 %v20
  %v38 = vunpack.c.l.b16 %v21
  %v39 = vunpack.c.l.b16 %v22
  %v40 = vpack.c.b16 %v36, %v35
  %v41 = vpack.c.b16 %v38, %v37
  %v42 = vpack.c.b16 %v39, %v39
  %vm45 = vcmask 277504
  %v47 = vsel %vm45, %v17, 0
  %vm49 = vcmask 1040384
  %v51 = vsel %vm49, %v42, 0
  %53 = vmatprep.subr.bf16.mxu0 0
  %54 = vmatpush1.bf16.msra.mxu0 0
  %55 = vmatprep.subr.bf16.mxu0 0
  %56 = vmatpush1.bf16.msra.mxu0 0
  %57 = vmatprep.subr.bf16.mxu0 0
  %58 = vmatpush1.bf16.msra.mxu0 0
  %59 = vmatprep.subr.bf16.mxu0 0
  %60 = vmatpush1.bf16.msra.mxu0 0
  %61 = vmatprep.subr.bf16.mxu0 0
  %62 = vmatpush1.bf16.msra.mxu0 0
  %63 = vmatprep.subr.bf16.mxu0 0
  %64 = vmatpush1.bf16.msra.mxu0 %v51
  %65 = vmatprep.subr.bf16.mxu0 0
  %66 = vmatpush1.bf16.msra.mxu0 %v41
  %67 = vmatprep.subr.bf16.mxu0 0
  %68 = vmatpush1.bf16.msra.mxu0 %v40
  %69 = vmatprep.subr.bf16.mxu0 0
  %70 = vmatpush2.bf16.msra.mxu0 0
  %71 = vmatprep.subr.bf16.mxu0 0
  %72 = vmatpush2.bf16.msra.mxu0 0
  %73 = vmatprep.subr.bf16.mxu0 0
  %74 = vmatpush2.bf16.msra.mxu0 0
  %75 = vmatprep.subr.bf16.mxu0 0
  %76 = vmatpush2.bf16.msra.mxu0 0
  %77 = vmatprep.subr.bf16.mxu0 0
  %78 = vmatpush2.bf16.msra.mxu0 0
  %79 = vmatprep.subr.bf16.mxu0 0
  %80 = vmatpush2.bf16.msra.mxu0 0
  %81 = vmatprep.subr.bf16.mxu0 0
  %82 = vmatpush2.bf16.msra.mxu0 0
  %83 = vmatprep.subr.bf16.mxu0 0
  %84 = vmatpush2.bf16.msra.mxu0 0
  %85 = vmatprep.mubr.bf16.mxu0 0
  %86 = vmatmul.mubr.bf16.gmra.mxu0 %v47
  %v87 = vpop.f32.mrf.mxu0
  %v88 = vadd.f32 %v28, %v87
  %v89 = vpop.f32.mrf.mxu0
  %v90 = vpop.f32.mrf.mxu0
  %v91 = vadd.f32 %v28, %v90
  %v92 = vpop.f32.mrf.mxu0
  %93 = vdwg.mxu0
  %vm94 = vcmask 261120
  %95 = vst.msk [vmem:[%s3] sm:$0xff] %vm94, %v88
  %96 = vst.msk [vmem:[%s3 + $0x8] sm:$0xff] %vm94, %v91
  // Predicated region
  $region14: #{neural_model_forward.8} parent=0 // pred_check
    _
  $region15: #{neural_model_forward.8} parent=0 // pred_check_branch
    %98 = sbr.rel (0) target = $region17
  $region16: #{neural_model_forward.8} parent=0 // pred_region
    _
  $region17: #{neural_model_forward.8} parent=0 // pred_fallthru
    _
  // Predicated region
  $region18: #{neural_model_forward.8} parent=0 // pred_check
    _
  $region19: #{neural_model_forward.8} parent=0 // pred_check_branch
    %100 = sbr.rel (0) target = $region21
  $region20: #{neural_model_forward.8} parent=0 // pred_region
    _
  $region21: #{neural_model_forward.8} parent=0 // pred_fallthru
    _

// kernel: neural_model_forward.9
$region0: #{neural_model_forward.9}
  #allocation0 [shape = 'u32[]', space=smem, size = 0x4, offset = 0x4, fixed_abs, tag = 'smem constant byte address 0x4 - core index']
  #allocation1 [shape = 'u32[144,128]{1,0:T(1,128)}', space=vmem, size = 0x12000, scoped, tag = 'internal scratch']
  %s0 = inlined_call_operand.vmem [shape: f32[16,32], index: 0, kind: input, shape index: {}]
  %s1 = inlined_call_operand.vmem [shape: f32[1,32], index: 1, kind: input, shape index: {}]
  %s2 = inlined_call_operand.vmem [shape: f32[1,32], index: 2, kind: input, shape index: {}]
  %s3 = inlined_call_operand.vmem [shape: bf16[32,96], index: 3, kind: input, shape index: {}]
  %s4 = inlined_call_operand.vmem [shape: f32[1,96], index: 4, kind: input, shape index: {}]
  %s5 = inlined_call_operand.vmem [shape: bf16[16,96], index: 5, kind: output, shape index: {}]
  %s6 = sld [smem:[#allocation0]]
  $region30: #{neural_model_forward.9} parent=0
    _
  %s8 = ssub.s32 1, %s6
  %s9 = scalar_select 0, %s8, %s6
  // Predicated region
  $region2: #{neural_model_forward.9} parent=0 // pred_check
    _
  $region3: #{neural_model_forward.9} parent=0 // pred_check_branch
    %11 = sbr.rel (0) target = $region5
  $region4: #{neural_model_forward.9} parent=0 // pred_region
    _
  $region5: #{neural_model_forward.9} parent=0 // pred_fallthru
    _
  // Predicated region
  $region6: #{neural_model_forward.9} parent=0 // pred_check
    _
  $region7: #{neural_model_forward.9} parent=0 // pred_check_branch
    %13 = sbr.rel (0) target = $region9
  $region8: #{neural_model_forward.9} parent=0 // pred_region
    _
  $region9: #{neural_model_forward.9} parent=0 // pred_fallthru
    _
  // Predicated region
  $region10: #{neural_model_forward.9} parent=0 // pred_check
    _
  $region11: #{neural_model_forward.9} parent=0 // pred_check_branch
    %15 = sbr.rel (0) target = $region13
  $region12: #{neural_model_forward.9} parent=0 // pred_region
    _
  $region13: #{neural_model_forward.9} parent=0 // pred_fallthru
    _
  // Predicated region
  $region14: #{neural_model_forward.9} parent=0 // pred_check
    _
  $region15: #{neural_model_forward.9} parent=0 // pred_check_branch
    %17 = sbr.rel (0) target = $region17
  $region16: #{neural_model_forward.9} parent=0 // pred_region
    _
  $region17: #{neural_model_forward.9} parent=0 // pred_fallthru
    _
  // Predicated region
  $region18: #{neural_model_forward.9} parent=0 // pred_check
    _
  $region19: #{neural_model_forward.9} parent=0 // pred_check_branch
    %19 = sbr.rel (0) target = $region21
  $region20: #{neural_model_forward.9} parent=0 // pred_region
    _
  $region21: #{neural_model_forward.9} parent=0 // pred_fallthru
    _
  %v21 = vld [vmem:[%s0] sm:$0xff]
  %v22 = vld [vmem:[%s0 + $0x8] sm:$0xff]
  %vm23 = vcmask 261120
  %v24 = vsel %vm23, %v21, 0.0
  %25 = vadd.xlane.f32.xlu0 %v24
  %v26 = vpop.xlane.xlu0 %25
  %v27 = vsel %vm23, %v22, 0.0
  %28 = vadd.xlane.f32.xlu0 %v27
  %v29 = vpop.xlane.xlu0 %28
  %v30 = vrcp.pop 32.0
  %v31 = vmul.f32 %v26, %v30
  %v32 = vmul.f32 %v29, %v30
  %v33 = vsub.f32 %v21, %v31
  %v34 = vsub.f32 %v22, %v32
  %v35 = vmul.f32 %v33, %v33
  %v36 = vmul.f32 %v34, %v34
  %v37 = vsel %vm23, %v35, 0.0
  %38 = vadd.xlane.f32.xlu0 %v37
  %v39 = vpop.xlane.xlu0 %38
  %v40 = vsel %vm23, %v36, 0.0
  %41 = vadd.xlane.f32.xlu0 %v40
  %v42 = vpop.xlane.xlu0 %41
  %v43 = vmul.f32 %v39, %v30
  %v44 = vmul.f32 %v42, %v30
  %v45 = vadd.f32 %v43, 1e-05
  %v46 = vadd.f32 %v44, 1e-05
  %v47 = vrsqrt.pop %v45
  %v48 = vrsqrt.pop %v46
  %v49 = vmul.f32 %v33, %v47
  %v50 = vmul.f32 %v34, %v48
  %v51 = vld [vmem:[%s1] sm:$0x1]
  %v53 = vlaneseq
  %v54 = vshrl.u32 %v53, 7
  %v55 = vsub.s32 0, %v54
  %v56 = vrot.slane %v51, %v55
  %v58 = vmul.f32 %v49, %v56
  %v59 = vmul.f32 %v50, %v56
  %v60 = vld [vmem:[%s2] sm:$0x1]
  %v62 = vlaneseq
  %v63 = vshrl.u32 %v62, 7
  %v64 = vsub.s32 0, %v63
  %v65 = vrot.slane %v60, %v64
  %v67 = vadd.f32 %v58, %v65
  %v68 = vadd.f32 %v59, %v65
  %v69 = vpack.c.bf16 %v68, %v67
  %v70 = vld [vmem:[%s3] sm:$0xf]
  %v71 = vld [vmem:[%s3 + $0x4] sm:$0xf]
  %v72 = vld [vmem:[%s3 + $0x8] sm:$0xf]
  %v73 = vld [vmem:[%s3 + $0xc] sm:$0xf]
  %v74 = vld [vmem:[%s4] sm:$0x1]
  %v76 = vlaneseq
  %v77 = vshrl.u32 %v76, 7
  %v78 = vsub.s32 0, %v77
  %v79 = vrot.slane %v74, %v78
  %v85 = vunpack.c.l.b16 %v70
  %v86 = vunpack.c.l.b16 %v71
  %v87 = vunpack.c.l.b16 %v72
  %v88 = vunpack.c.l.b16 %v73
  %v89 = vpack.c.b16 %v86, %v85
  %v90 = vpack.c.b16 %v88, %v87
  %v94 = vsel %vm23, %v69, 0
  %96 = vmatprep.subr.bf16.mxu0 0
  %97 = vmatpush1.bf16.msra.mxu0 0
  %98 = vmatprep.subr.bf16.mxu0 0
  %99 = vmatpush1.bf16.msra.mxu0 0
  %100 = vmatprep.subr.bf16.mxu0 0
  %101 = vmatpush1.bf16.msra.mxu0 0
  %102 = vmatprep.subr.bf16.mxu0 0
  %103 = vmatpush1.bf16.msra.mxu0 0
  %104 = vmatprep.subr.bf16.mxu0 0
  %105 = vmatpush1.bf16.msra.mxu0 0
  %106 = vmatprep.subr.bf16.mxu0 0
  %107 = vmatpush1.bf16.msra.mxu0 0
  %108 = vmatprep.subr.bf16.mxu0 0
  %109 = vmatpush1.bf16.msra.mxu0 %v90
  %110 = vmatprep.subr.bf16.mxu0 0
  %111 = vmatpush1.bf16.msra.mxu0 %v89
  %112 = vmatprep.subr.bf16.mxu0 0
  %113 = vmatpush2.bf16.msra.mxu0 0
  %114 = vmatprep.subr.bf16.mxu0 0
  %115 = vmatpush2.bf16.msra.mxu0 0
  %116 = vmatprep.subr.bf16.mxu0 0
  %117 = vmatpush2.bf16.msra.mxu0 0
  %118 = vmatprep.subr.bf16.mxu0 0
  %119 = vmatpush2.bf16.msra.mxu0 0
  %120 = vmatprep.subr.bf16.mxu0 0
  %121 = vmatpush2.bf16.msra.mxu0 0
  %122 = vmatprep.subr.bf16.mxu0 0
  %123 = vmatpush2.bf16.msra.mxu0 0
  %124 = vmatprep.subr.bf16.mxu0 0
  %125 = vmatpush2.bf16.msra.mxu0 0
  %126 = vmatprep.subr.bf16.mxu0 0
  %127 = vmatpush2.bf16.msra.mxu0 0
  %128 = vmatprep.mubr.bf16.mxu0 0
  %129 = vmatmul.mubr.bf16.gmra.mxu0 %v94
  %v130 = vpop.f32.mrf.mxu0
  %v131 = vadd.f32 %v79, %v130
  %v132 = vpop.f32.mrf.mxu0
  %v133 = vpop.f32.mrf.mxu0
  %v134 = vadd.f32 %v79, %v133
  %v135 = vpop.f32.mrf.mxu0
  %136 = vdwg.mxu0
  %v137 = vpack.c.bf16 %v134, %v131
  %v139 = vunpack.c.l.b16 %v137
  %v140 = vunpack.c.h.b16 %v137
  %v141 = vpack.c.b16 %v139, %v139
  %v142 = vpack.c.b16 %v140, %v140
  %vm145 = vcmask 781312
  %146 = vst.msk [vmem:[%s5] sm:$0xf] %vm145, %v141
  %147 = vst.msk [vmem:[%s5 + $0x4] sm:$0xf] %vm145, %v142
  // Predicated region
  $region22: #{neural_model_forward.9} parent=0 // pred_check
    _
  $region23: #{neural_model_forward.9} parent=0 // pred_check_branch
    %149 = sbr.rel (0) target = $region25
  $region24: #{neural_model_forward.9} parent=0 // pred_region
    _
  $region25: #{neural_model_forward.9} parent=0 // pred_fallthru
    _
  // Predicated region
  $region26: #{neural_model_forward.9} parent=0 // pred_check
    _
  $region27: #{neural_model_forward.9} parent=0 // pred_check_branch
    %151 = sbr.rel (0) target = $region29
  $region28: #{neural_model_forward.9} parent=0 // pred_region
    _
  $region29: #{neural_model_forward.9} parent=0 // pred_fallthru
    _

// kernel: neural_model_forward.10
$region0: #{neural_model_forward.10}
  #allocation0 [shape = 'u32[]', space=smem, size = 0x4, offset = 0x4, fixed_abs, tag = 'smem constant byte address 0x4 - core index']
  #allocation1 [shape = 'u32[144,128]{1,0:T(1,128)}', space=vmem, size = 0x12000, scoped, tag = 'internal scratch']
  #allocation2 [shape = 'bf16[8,32]{1,0:T(8,128)(2,1)}', space=vmem, size = 0x800, scoped, tag = 'scratch operand']
  %s0 = inlined_call_operand.vmem [shape: bf16[2,8,96], index: 0, kind: input, shape index: {}]
  %s1 = inlined_call_operand.vmem [shape: f32[2,8,32], index: 1, kind: input, shape index: {}]
  %s2 = inlined_call_operand.vmem [shape: bf16[32,32], index: 2, kind: input, shape index: {}]
  %s3 = inlined_call_operand.vmem [shape: f32[1,32], index: 3, kind: input, shape index: {}]
  %s4 = inlined_call_operand.vmem [shape: f32[2,8,32], index: 4, kind: output, shape index: {}]
  %s5 = sld [smem:[#allocation0]]
  $region49: #{neural_model_forward.10} parent=0
    _
  %s7 = ssub.s32 1, %s5
  %s8 = scalar_select 0, %s7, %s5
  loop: start=0, step=1, limit=4
  $region2: #{neural_model_forward.10} parent=0 // loop_pre_header
    _
  $region3: #{neural_model_forward.10} parent=0 // loop_header
    %s10 = sphi 0, %s14
    %p11 = scmp.ge.s32.totalorder %s10, 4
    %s17 = sphi 0, %s29
    %s18 = sphi 0, %s25
    %s19 = sphi 0, %s17
    %s20 = sphi 0, %s18
    %s21 = sphi 0, %s19
    %s22 = sphi 0, %s20
    %s32 = sphi 0, %s34
    %s35 = sphi 0, %s32
    %s36 = sphi 0, %s35
    %s52 = sphi 0, %s36
    %s60 = sphi 0, %s62
    %s63 = sphi 0, %s60
    %s64 = sphi 0, %s63
    %s80 = sphi 0, %s64
    %s84 = sphi 0, %s84
    %s86 = sphi 0, %s84
    %s87 = sphi 0, %s86
    %s101 = sphi 0, %s87
    %s105 = sphi 0, %s105
    %s107 = sphi 0, %s105
    %s108 = sphi 0, %s107
    %s122 = sphi 0, %s108
    %s130 = sphi 0, %s132
    %s133 = sphi 0, %s130
    %s134 = sphi 0, %s133
    %s150 = sphi 0, %s134
  $region4: #{neural_model_forward.10} parent=0 // loop_header_branch
    %13 = sbr.rel (%p11) target = $region8
  $region5: #{neural_model_forward.10} parent=0 // loop_body
    %s15 = ssub.s32 %s10, 1
    %s16 = ssub.s32 %s10, 2
    %s23 = sadd.s32 1, %s18
    %p24 = scmp.ge.s32.totalorder %s23, 1
    %s25 = scalar_select %p24, 0, %s23
    %s26 = sadd.s32 1, %s17
    %s27 = scalar_select %p24, %s26, %s17
    %p28 = scmp.ge.s32.totalorder %s27, 2
    %s29 = scalar_select %p28, 0, %s27
    %s30 = ssub.s32 %s17, %s29
    %p31 = scmp.eq.s32.totalorder %s30, 0
    %s33 = sadd.s32 %s32, 1
    %s34 = scalar_select %p31, %s32, %s33
    %p37 = pneg %p31
    %p38 = scmp.eq.s32.totalorder %s10, 1
    %p39 = por %p37, %p38
    %p40 = scmp.ne.s32.totalorder %s32, %s35
    %p41 = scmp.eq.s32.totalorder %s10, 0
    %p42 = por %p40, %p41
    %p43 = scmp.ne.s32.totalorder %s32, %s35
    %p44 = scmp.eq.s32.totalorder %s15, 1
    %p45 = por %p43, %p44
    %p46 = scmp.ne.s32.totalorder %s35, %s36
    %p47 = scmp.eq.s32.totalorder %s15, 0
    %p48 = por %p46, %p47
    %p49 = scmp.ne.s32.totalorder %s35, %s36
    %p50 = scmp.eq.s32.totalorder %s16, 1
    %p51 = por %p49, %p50
    %p53 = scmp.ne.s32.totalorder %s36, %s52
    %p54 = scmp.eq.s32.totalorder %s16, 0
    %p55 = por %p53, %p54
    %s56 = ssub.s32 %s17, %s29
    %s57 = ssub.s32 %s18, %s25
    %s58 = sor.u32 %s56, %s57
    %p59 = scmp.eq.s32.totalorder %s58, 0
    %s61 = sadd.s32 %s60, 1
    %s62 = scalar_select %p59, %s60, %s61
    %p65 = pneg %p59
    %p66 = scmp.eq.s32.totalorder %s10, 1
    %p67 = por %p65, %p66
    %p68 = scmp.ne.s32.totalorder %s60, %s63
    %p69 = scmp.eq.s32.totalorder %s10, 0
    %p70 = por %p68, %p69
    %p71 = scmp.ne.s32.totalorder %s60, %s63
    %p72 = scmp.eq.s32.totalorder %s15, 1
    %p73 = por %p71, %p72
    %p74 = scmp.ne.s32.totalorder %s63, %s64
    %p75 = scmp.eq.s32.totalorder %s15, 0
    %p76 = por %p74, %p75
    %p77 = scmp.ne.s32.totalorder %s63, %s64
    %p78 = scmp.eq.s32.totalorder %s16, 1
    %p79 = por %p77, %p78
    %p81 = scmp.ne.s32.totalorder %s64, %s80
    %p82 = scmp.eq.s32.totalorder %s16, 0
    %p83 = por %p81, %p82
    %s85 = sadd.s32 %s84, 1
    %p88 = scmp.eq.s32.totalorder %s10, 1
    %p89 = scmp.ne.s32.totalorder %s84, %s86
    %p90 = scmp.eq.s32.totalorder %s10, 0
    %p91 = por %p89, %p90
    %p92 = scmp.ne.s32.totalorder %s84, %s86
    %p93 = scmp.eq.s32.totalorder %s15, 1
    %p94 = por %p92, %p93
    %p95 = scmp.ne.s32.totalorder %s86, %s87
    %p96 = scmp.eq.s32.totalorder %s15, 0
    %p97 = por %p95, %p96
    %p98 = scmp.ne.s32.totalorder %s86, %s87
    %p99 = scmp.eq.s32.totalorder %s16, 1
    %p100 = por %p98, %p99
    %p102 = scmp.ne.s32.totalorder %s87, %s101
    %p103 = scmp.eq.s32.totalorder %s16, 0
    %p104 = por %p102, %p103
    %s106 = sadd.s32 %s105, 1
    %p109 = scmp.eq.s32.totalorder %s10, 1
    %p110 = scmp.ne.s32.totalorder %s105, %s107
    %p111 = scmp.eq.s32.totalorder %s10, 0
    %p112 = por %p110, %p111
    %p113 = scmp.ne.s32.totalorder %s105, %s107
    %p114 = scmp.eq.s32.totalorder %s15, 1
    %p115 = por %p113, %p114
    %p116 = scmp.ne.s32.totalorder %s107, %s108
    %p117 = scmp.eq.s32.totalorder %s15, 0
    %p118 = por %p116, %p117
    %p119 = scmp.ne.s32.totalorder %s107, %s108
    %p120 = scmp.eq.s32.totalorder %s16, 1
    %p121 = por %p119, %p120
    %p123 = scmp.ne.s32.totalorder %s108, %s122
    %p124 = scmp.eq.s32.totalorder %s16, 0
    %p125 = por %p123, %p124
    %s126 = ssub.s32 %s17, %s29
    %s127 = ssub.s32 %s18, %s25
    %s128 = sor.u32 %s126, %s127
    %p129 = scmp.eq.s32.totalorder %s128, 0
    %s131 = sadd.s32 %s130, 1
    %s132 = scalar_select %p129, %s130, %s131
    %p135 = pneg %p129
    %p136 = scmp.eq.s32.totalorder %s10, 1
    %p137 = por %p135, %p136
    %p138 = scmp.ne.s32.totalorder %s130, %s133
    %p139 = scmp.eq.s32.totalorder %s10, 0
    %p140 = por %p138, %p139
    %p141 = scmp.ne.s32.totalorder %s130, %s133
    %p142 = scmp.eq.s32.totalorder %s15, 1
    %p143 = por %p141, %p142
    %p144 = scmp.ne.s32.totalorder %s133, %s134
    %p145 = scmp.eq.s32.totalorder %s15, 0
    %p146 = por %p144, %p145
    %p147 = scmp.ne.s32.totalorder %s133, %s134
    %p148 = scmp.eq.s32.totalorder %s16, 1
    %p149 = por %p147, %p148
    %p151 = scmp.ne.s32.totalorder %s134, %s150
    %p152 = scmp.eq.s32.totalorder %s16, 0
    %p153 = por %p151, %p152
    %p154 = scmp.le.s32.totalorder 1, %s10
    %p155 = scmp.lt.s32.totalorder %s10, 3
    %p156 = pnand %p154, %p155
    %p157 = pneg %p156
    // Predicated region
    $region9: #{neural_model_forward.10} parent=5 // pred_check
      _
    $region10: #{neural_model_forward.10} parent=5 // pred_check_branch
      %159 = sbr.rel (%p156) target = $region12
    $region11: #{neural_model_forward.10} parent=5 // pred_region
      %s160 = ssub.s32 %s10, 1
      // Predicated region
      $region13: #{neural_model_forward.10} parent=11 // pred_check
        %p161 = pneg %p97
      $region14: #{neural_model_forward.10} parent=11 // pred_check_branch
        %163 = sbr.rel (%p161) target = $region16
      $region15: #{neural_model_forward.10} parent=11 // pred_region
        _
      $region16: #{neural_model_forward.10} parent=11 // pred_fallthru
        _
      // Predicated region
      $region17: #{neural_model_forward.10} parent=11 // pred_check
        %p164 = pneg %p118
      $region18: #{neural_model_forward.10} parent=11 // pred_check_branch
        %166 = sbr.rel (%p164) target = $region20
      $region19: #{neural_model_forward.10} parent=11 // pred_region
        _
      $region20: #{neural_model_forward.10} parent=11 // pred_fallthru
        _
    $region12: #{neural_model_forward.10} parent=5 // pred_fallthru
      _
    %p167 = scmp.lt.s32.totalorder %s10, 2
    // Predicated region
    $region21: #{neural_model_forward.10} parent=5 // pred_check
      %p168 = pneg %p167
    $region22: #{neural_model_forward.10} parent=5 // pred_check_branch
      %170 = sbr.rel (%p168) target = $region24
    $region23: #{neural_model_forward.10} parent=5 // pred_region
      // Predicated region
      $region25: #{neural_model_forward.10} parent=23 // pred_check
        %p171 = pneg %p42
      $region26: #{neural_model_forward.10} parent=23 // pred_check_branch
        %173 = sbr.rel (%p171) target = $region28
      $region27: #{neural_model_forward.10} parent=23 // pred_region
        %p174 = scmp.lt.s32.totalorder %s17, 1
        %s175 = scalar_select %p174, %s17, 1
        %s176 = smul.addr %s175, 4
        %s177 = scalar_lea.vmem %s0, %s176
      $region28: #{neural_model_forward.10} parent=23 // pred_fallthru
        _
      // Predicated region
      $region29: #{neural_model_forward.10} parent=23 // pred_check
        %p178 = pneg %p70
      $region30: #{neural_model_forward.10} parent=23 // pred_check_branch
        %180 = sbr.rel (%p178) target = $region32
      $region31: #{neural_model_forward.10} parent=23 // pred_region
        %p181 = scmp.lt.s32.totalorder %s17, 1
        %s182 = scalar_select %p181, %s17, 1
        %p183 = scmp.lt.s32.totalorder %s18, 0
        %s184 = scalar_select %p183, %s18, 0
        %s185 = sadd.s32 %s184, %s182
        %s186 = smul.addr %s185, 8
        %s187 = scalar_lea.vmem %s1, %s186
      $region32: #{neural_model_forward.10} parent=23 // pred_fallthru
        _
    $region24: #{neural_model_forward.10} parent=5 // pred_fallthru
      _
    %p188 = scmp.le.s32.totalorder 1, %s10
    %p189 = scmp.lt.s32.totalorder %s10, 3
    %p190 = pnand %p188, %p189
    %p191 = pneg %p190
    // Predicated region
    $region33: #{neural_model_forward.10} parent=5 // pred_check
      _
    $region34: #{neural_model_forward.10} parent=5 // pred_check_branch
      %193 = sbr.rel (%p190) target = $region36
    $region35: #{neural_model_forward.10} parent=5 // pred_region
      %s194 = ssub.s32 %s10, 1
      %p195 = scmp.lt.s32.totalorder %s19, 1
      %s196 = scalar_select %p195, %s19, 1
      %s197 = smul.addr %s196, 4
      %s198 = scalar_lea.vmem %s0, %s197
      %p199 = pneg %p48
      %p200 = pneg %p45
      %p201 = scmp.lt.s32.totalorder %s19, 1
      %s202 = scalar_select %p201, %s19, 1
      %p203 = scmp.lt.s32.totalorder %s20, 0
      %s204 = scalar_select %p203, %s20, 0
      %s205 = sadd.s32 %s204, %s202
      %s206 = smul.addr %s205, 8
      %s207 = scalar_lea.vmem %s1, %s206
      %p208 = pneg %p76
      %p209 = pneg %p73
      %p210 = pneg %p97
      %p211 = pneg %p94
      %p212 = pneg %p118
      %p213 = pneg %p115
      %p214 = pneg %p146
      %p215 = pneg %p143
      %p216 = scmp.lt.s32.totalorder %s19, 1
      %s217 = scalar_select %p216, %s19, 1
      %p218 = scmp.lt.s32.totalorder %s20, 0
      %s219 = scalar_select %p218, %s20, 0
      %s220 = sadd.s32 %s219, %s217
      %s221 = smul.addr %s220, 8
      %s222 = scalar_lea.vmem %s4, %s221
      %p223 = scmp.lt.s32.totalorder %s19, 1
      %s224 = scalar_select %p223, %s19, 1
      %s225 = smul.addr %s224, 4
      %s226 = scalar_lea.vmem %s0, %s225
      %p227 = scmp.lt.s32.totalorder %s19, 1
      %s228 = scalar_select %p227, %s19, 1
      %p229 = scmp.lt.s32.totalorder %s20, 0
      %s230 = scalar_select %p229, %s20, 0
      %s231 = sadd.s32 %s230, %s228
      %s232 = smul.addr %s231, 8
      %s233 = scalar_lea.vmem %s1, %s232
      %p234 = scmp.lt.s32.totalorder %s19, 1
      %s235 = scalar_select %p234, %s19, 1
      %p236 = scmp.lt.s32.totalorder %s20, 0
      %s237 = scalar_select %p236, %s20, 0
      %s238 = sadd.s32 %s237, %s235
      %s239 = smul.addr %s238, 8
      %s240 = scalar_lea.vmem %s4, %s239
      %s242 = smul.u32 %s20, 8
      %s243 = sshra.s32 %s242, 3
      %s244 = sand.u32 %s242, 7
      %s245 = smul.addr %s243, 4
      %s246 = scalar_lea.vmem %s226, %s245
      %v247 = vld [vmem:[%s246] sm:$0xf]
      %v248 = vld [vmem:[%s226] sm:$0xf]
      %v250 = vunpack.c.l.b16 %v248
      %v251 = vpack.c.b16 %v250, %v250
      %252 = vrot.lane.b32.xlu0 %v251, 96
      %v253 = vpop.permute.xlu0 %252
      %vm254 = vcmask 64512
      %v256 = vsel %vm254, %v247, 0
      %v259 = vsel %vm254, %v253, 0
      %261 = vmatprep.subr.bf16.mxu0 0
      %262 = vmatpush1.bf16.xpose.msra.mxu0 0
      %263 = vmatprep.subr.bf16.mxu0 0
      %264 = vmatpush1.bf16.xpose.msra.mxu0 0
      %265 = vmatprep.subr.bf16.mxu0 0
      %266 = vmatpush1.bf16.xpose.msra.mxu0 0
      %267 = vmatprep.subr.bf16.mxu0 0
      %268 = vmatpush1.bf16.xpose.msra.mxu0 0
      %269 = vmatprep.subr.bf16.mxu0 0
      %270 = vmatpush1.bf16.xpose.msra.mxu0 0
      %271 = vmatprep.subr.bf16.mxu0 0
      %272 = vmatpush1.bf16.xpose.msra.mxu0 0
      %273 = vmatprep.subr.bf16.mxu0 0
      %274 = vmatpush1.bf16.xpose.msra.mxu0 0
      %275 = vmatprep.subr.bf16.mxu0 0
      %276 = vmatpush1.bf16.xpose.msra.mxu0 %v259
      %277 = vmatprep.subr.bf16.mxu0 0
      %278 = vmatpush2.bf16.xpose.msra.mxu0 0
      %279 = vmatprep.subr.bf16.mxu0 0
      %280 = vmatpush2.bf16.xpose.msra.mxu0 0
      %281 = vmatprep.subr.bf16.mxu0 0
      %282 = vmatpush2.bf16.xpose.msra.mxu0 0
      %283 = vmatprep.subr.bf16.mxu0 0
      %284 = vmatpush2.bf16.xpose.msra.mxu0 0
      %285 = vmatprep.subr.bf16.mxu0 0
      %286 = vmatpush2.bf16.xpose.msra.mxu0 0
      %287 = vmatprep.subr.bf16.mxu0 0
      %288 = vmatpush2.bf16.xpose.msra.mxu0 0
      %289 = vmatprep.subr.bf16.mxu0 0
      %290 = vmatpush2.bf16.xpose.msra.mxu0 0
      %291 = vmatprep.subr.bf16.mxu0 0
      %292 = vmatpush2.bf16.xpose.msra.mxu0 0
      %293 = vmatprep.mubr.bf16.mxu0 0
      %294 = vmatmul.mubr.bf16.gmra.mxu0 %v256
      %v295 = vpop.f32.mrf.mxu0
      %v296 = vadd.f32 0.0, %v295
      %v297 = vpop.f32.mrf.mxu0
      %v298 = vpop.f32.mrf.mxu0
      %v299 = vpop.f32.mrf.mxu0
      %300 = vdwg.mxu0
      %v301 = vsel %vm254, %v296, -inf
      %302 = vmax.xlane.f32.xlu0 %v301
      %v303 = vpop.xlane.xlu0 %302
      %v304 = vsub.f32 %v296, %v303
      %v305 = vmul.f32 %v304, 1.442695
      %v306 = vpow.pop %v305
      %v307 = vsel %vm254, %v306, 0.0
      %308 = vadd.xlane.f32.xlu0 %v307
      %v309 = vpop.xlane.xlu0 %308
      %v310 = vpack.c.bf16 %v306, %v306
      %311 = vrot.lane.b32.xlu0 %v251, 64
      %v312 = vpop.permute.xlu0 %311
      %v314 = vsel %vm254, %v310, 0
      %vm316 = vcmask 1043456
      %v318 = vsel %vm316, %v312, 0
      %320 = vmatprep.subr.bf16.mxu0 0
      %321 = vmatpush1.bf16.msra.mxu0 0
      %322 = vmatprep.subr.bf16.mxu0 0
      %323 = vmatpush1.bf16.msra.mxu0 0
      %324 = vmatprep.subr.bf16.mxu0 0
      %325 = vmatpush1.bf16.msra.mxu0 0
      %326 = vmatprep.subr.bf16.mxu0 0
      %327 = vmatpush1.bf16.msra.mxu0 0
      %328 = vmatprep.subr.bf16.mxu0 0
      %329 = vmatpush1.bf16.msra.mxu0 0
      %330 = vmatprep.subr.bf16.mxu0 0
      %331 = vmatpush1.bf16.msra.mxu0 0
      %332 = vmatprep.subr.bf16.mxu0 0
      %333 = vmatpush1.bf16.msra.mxu0 0
      %334 = vmatprep.subr.bf16.mxu0 0
      %335 = vmatpush1.bf16.msra.mxu0 %v318
      %336 = vmatprep.subr.bf16.mxu0 0
      %337 = vmatpush2.bf16.msra.mxu0 0
      %338 = vmatprep.subr.bf16.mxu0 0
      %339 = vmatpush2.bf16.msra.mxu0 0
      %340 = vmatprep.subr.bf16.mxu0 0
      %341 = vmatpush2.bf16.msra.mxu0 0
      %342 = vmatprep.subr.bf16.mxu0 0
      %343 = vmatpush2.bf16.msra.mxu0 0
      %344 = vmatprep.subr.bf16.mxu0 0
      %345 = vmatpush2.bf16.msra.mxu0 0
      %346 = vmatprep.subr.bf16.mxu0 0
      %347 = vmatpush2.bf16.msra.mxu0 0
      %348 = vmatprep.subr.bf16.mxu0 0
      %349 = vmatpush2.bf16.msra.mxu0 0
      %350 = vmatprep.subr.bf16.mxu0 0
      %351 = vmatpush2.bf16.msra.mxu0 0
      %352 = vmatprep.mubr.bf16.mxu0 0
      %353 = vmatmul.mubr.bf16.gmra.mxu0 %v314
      %v354 = vpop.f32.mrf.mxu0
      %v355 = vadd.f32 0.0, %v354
      %v356 = vpop.f32.mrf.mxu0
      %v357 = vpop.f32.mrf.mxu0
      %v358 = vpop.f32.mrf.mxu0
      %359 = vdwg.mxu0
      %v360 = vrcp.pop %v309
      %v361 = vmul.f32 %v355, %v360
      %v362 = vpack.c.bf16 %v361, %v361
      %vm363 = vcmask 60416
      %364 = vst.msk [vmem:[#allocation2] sm:$0xf] %vm363, %v362
      %v365 = vld [vmem:[%s246] sm:$0xf]
      %v366 = vld [vmem:[%s226] sm:$0xf]
      %v368 = vunpack.c.l.b16 %v365
      %v369 = vpack.c.b16 %v368, %v368
      %370 = vrot.lane.b32.xlu0 %v369, 120
      %v371 = vpop.permute.xlu0 %370
      %v373 = vunpack.c.l.b16 %v366
      %v374 = vpack.c.b16 %v373, %v373
      %375 = vrot.lane.b32.xlu0 %v374, 88
      %v376 = vpop.permute.xlu0 %375
      %v378 = vsel %vm254, %v371, 0
      %v381 = vsel %vm254, %v376, 0
      %383 = vmatprep.subr.bf16.mxu0 0
      %384 = vmatpush1.bf16.xpose.msra.mxu0 0
      %385 = vmatprep.subr.bf16.mxu0 0
      %386 = vmatpush1.bf16.xpose.msra.mxu0 0
      %387 = vmatprep.subr.bf16.mxu0 0
      %388 = vmatpush1.bf16.xpose.msra.mxu0 0
      %389 = vmatprep.subr.bf16.mxu0 0
      %390 = vmatpush1.bf16.xpose.msra.mxu0 0
      %391 = vmatprep.subr.bf16.mxu0 0
      %392 = vmatpush1.bf16.xpose.msra.mxu0 0
      %393 = vmatprep.subr.bf16.mxu0 0
      %394 = vmatpush1.bf16.xpose.msra.mxu0 0
      %395 = vmatprep.subr.bf16.mxu0 0
      %396 = vmatpush1.bf16.xpose.msra.mxu0 0
      %397 = vmatprep.subr.bf16.mxu0 0
      %398 = vmatpush1.bf16.xpose.msra.mxu0 %v381
      %399 = vmatprep.subr.bf16.mxu0 0
      %400 = vmatpush2.bf16.xpose.msra.mxu0 0
      %401 = vmatprep.subr.bf16.mxu0 0
      %402 = vmatpush2.bf16.xpose.msra.mxu0 0
      %403 = vmatprep.subr.bf16.mxu0 0
      %404 = vmatpush2.bf16.xpose.msra.mxu0 0
      %405 = vmatprep.subr.bf16.mxu0 0
      %406 = vmatpush2.bf16.xpose.msra.mxu0 0
      %407 = vmatprep.subr.bf16.mxu0 0
      %408 = vmatpush2.bf16.xpose.msra.mxu0 0
      %409 = vmatprep.subr.bf16.mxu0 0
      %410 = vmatpush2.bf16.xpose.msra.mxu0 0
      %411 = vmatprep.subr.bf16.mxu0 0
      %412 = vmatpush2.bf16.xpose.msra.mxu0 0
      %413 = vmatprep.subr.bf16.mxu0 0
      %414 = vmatpush2.bf16.xpose.msra.mxu0 0
      %415 = vmatprep.mubr.bf16.mxu0 0
      %416 = vmatmul.mubr.bf16.gmra.mxu0 %v378
      %v417 = vpop.f32.mrf.mxu0
      %v418 = vadd.f32 0.0, %v417
      %v419 = vpop.f32.mrf.mxu0
      %v420 = vpop.f32.mrf.mxu0
      %v421 = vpop.f32.mrf.mxu0
      %422 = vdwg.mxu0
      %v423 = vsel %vm254, %v418, -inf
      %424 = vmax.xlane.f32.xlu0 %v423
      %v425 = vpop.xlane.xlu0 %424
      %v426 = vsub.f32 %v418, %v425
      %v427 = vmul.f32 %v426, 1.442695
      %v428 = vpow.pop %v427
      %v429 = vsel %vm254, %v428, 0.0
      %430 = vadd.xlane.f32.xlu0 %v429
      %v431 = vpop.xlane.xlu0 %430
      %v432 = vpack.c.bf16 %v428, %v428
      %433 = vrot.lane.b32.xlu0 %v374, 56
      %v434 = vpop.permute.xlu0 %433
      %v436 = vsel %vm254, %v432, 0
      %v439 = vsel %vm316, %v434, 0
      %441 = vmatprep.subr.bf16.mxu0 0
      %442 = vmatpush1.bf16.msra.mxu0 0
      %443 = vmatprep.subr.bf16.mxu0 0
      %444 = vmatpush1.bf16.msra.mxu0 0
      %445 = vmatprep.subr.bf16.mxu0 0
      %446 = vmatpush1.bf16.msra.mxu0 0
      %447 = vmatprep.subr.bf16.mxu0 0
      %448 = vmatpush1.bf16.msra.mxu0 0
      %449 = vmatprep.subr.bf16.mxu0 0
      %450 = vmatpush1.bf16.msra.mxu0 0
      %451 = vmatprep.subr.bf16.mxu0 0
      %452 = vmatpush1.bf16.msra.mxu0 0
      %453 = vmatprep.subr.bf16.mxu0 0
      %454 = vmatpush1.bf16.msra.mxu0 0
      %455 = vmatprep.subr.bf16.mxu0 0
      %456 = vmatpush1.bf16.msra.mxu0 %v439
      %457 = vmatprep.subr.bf16.mxu0 0
      %458 = vmatpush2.bf16.msra.mxu0 0
      %459 = vmatprep.subr.bf16.mxu0 0
      %460 = vmatpush2.bf16.msra.mxu0 0
      %461 = vmatprep.subr.bf16.mxu0 0
      %462 = vmatpush2.bf16.msra.mxu0 0
      %463 = vmatprep.subr.bf16.mxu0 0
      %464 = vmatpush2.bf16.msra.mxu0 0
      %465 = vmatprep.subr.bf16.mxu0 0
      %466 = vmatpush2.bf16.msra.mxu0 0
      %467 = vmatprep.subr.bf16.mxu0 0
      %468 = vmatpush2.bf16.msra.mxu0 0
      %469 = vmatprep.subr.bf16.mxu0 0
      %470 = vmatpush2.bf16.msra.mxu0 0
      %471 = vmatprep.subr.bf16.mxu0 0
      %472 = vmatpush2.bf16.msra.mxu0 0
      %473 = vmatprep.mubr.bf16.mxu0 0
      %474 = vmatmul.mubr.bf16.gmra.mxu0 %v436
      %v475 = vpop.f32.mrf.mxu0
      %v476 = vadd.f32 0.0, %v475
      %v477 = vpop.f32.mrf.mxu0
      %v478 = vpop.f32.mrf.mxu0
      %v479 = vpop.f32.mrf.mxu0
      %480 = vdwg.mxu0
      %v481 = vrcp.pop %v431
      %v482 = vmul.f32 %v476, %v481
      %v483 = vpack.c.bf16 %v482, %v482
      %v485 = vunpack.c.l.b16 %v483
      %v486 = vpack.c.b16 %v485, %v485
      %487 = vrot.lane.b32.xlu0 %v486, 8
      %v488 = vpop.permute.xlu0 %487
      %vm490 = vcmask 126016
      %491 = vst.msk [vmem:[#allocation2] sm:$0xf] %vm490, %v488
      %v492 = vld [vmem:[%s246] sm:$0xf]
      %v493 = vld [vmem:[%s226] sm:$0xf]
      %v495 = vunpack.c.l.b16 %v492
      %v496 = vpack.c.b16 %v495, %v495
      %497 = vrot.lane.b32.xlu0 %v496, 112
      %v498 = vpop.permute.xlu0 %497
      %v500 = vunpack.c.l.b16 %v493
      %v501 = vpack.c.b16 %v500, %v500
      %502 = vrot.lane.b32.xlu0 %v501, 80
      %v503 = vpop.permute.xlu0 %502
      %v505 = vsel %vm254, %v498, 0
      %v508 = vsel %vm254, %v503, 0
      %510 = vmatprep.subr.bf16.mxu0 0
      %511 = vmatpush1.bf16.xpose.msra.mxu0 0
      %512 = vmatprep.subr.bf16.mxu0 0
      %513 = vmatpush1.bf16.xpose.msra.mxu0 0
      %514 = vmatprep.subr.bf16.mxu0 0
      %515 = vmatpush1.bf16.xpose.msra.mxu0 0
      %516 = vmatprep.subr.bf16.mxu0 0
      %517 = vmatpush1.bf16.xpose.msra.mxu0 0
      %518 = vmatprep.subr.bf16.mxu0 0
      %519 = vmatpush1.bf16.xpose.msra.mxu0 0
      %520 = vmatprep.subr.bf16.mxu0 0
      %521 = vmatpush1.bf16.xpose.msra.mxu0 0
      %522 = vmatprep.subr.bf16.mxu0 0
      %523 = vmatpush1.bf16.xpose.msra.mxu0 0
      %524 = vmatprep.subr.bf16.mxu0 0
      %525 = vmatpush1.bf16.xpose.msra.mxu0 %v508
      %526 = vmatprep.subr.bf16.mxu0 0
      %527 = vmatpush2.bf16.xpose.msra.mxu0 0
      %528 = vmatprep.subr.bf16.mxu0 0
      %529 = vmatpush2.bf16.xpose.msra.mxu0 0
      %530 = vmatprep.subr.bf16.mxu0 0
      %531 = vmatpush2.bf16.xpose.msra.mxu0 0
      %532 = vmatprep.subr.bf16.mxu0 0
      %533 = vmatpush2.bf16.xpose.msra.mxu0 0
      %534 = vmatprep.subr.bf16.mxu0 0
      %535 = vmatpush2.bf16.xpose.msra.mxu0 0
      %536 = vmatprep.subr.bf16.mxu0 0
      %537 = vmatpush2.bf16.xpose.msra.mxu0 0
      %538 = vmatprep.subr.bf16.mxu0 0
      %539 = vmatpush2.bf16.xpose.msra.mxu0 0
      %540 = vmatprep.subr.bf16.mxu0 0
      %541 = vmatpush2.bf16.xpose.msra.mxu0 0
      %542 = vmatprep.mubr.bf16.mxu0 0
      %543 = vmatmul.mubr.bf16.gmra.mxu0 %v505
      %v544 = vpop.f32.mrf.mxu0
      %v545 = vadd.f32 0.0, %v544
      %v546 = vpop.f32.mrf.mxu0
      %v547 = vpop.f32.mrf.mxu0
      %v548 = vpop.f32.mrf.mxu0
      %549 = vdwg.mxu0
      %v550 = vsel %vm254, %v545, -inf
      %551 = vmax.xlane.f32.xlu0 %v550
      %v552 = vpop.xlane.xlu0 %551
      %v553 = vsub.f32 %v545, %v552
      %v554 = vmul.f32 %v553, 1.442695
      %v555 = vpow.pop %v554
      %v556 = vsel %vm254, %v555, 0.0
      %557 = vadd.xlane.f32.xlu0 %v556
      %v558 = vpop.xlane.xlu0 %557
      %v559 = vpack.c.bf16 %v555, %v555
      %560 = vrot.lane.b32.xlu0 %v501, 48
      %v561 = vpop.permute.xlu0 %560
      %v563 = vsel %vm254, %v559, 0
      %v566 = vsel %vm316, %v561, 0
      %568 = vmatprep.subr.bf16.mxu0 0
      %569 = vmatpush1.bf16.msra.mxu0 0
      %570 = vmatprep.subr.bf16.mxu0 0
      %571 = vmatpush1.bf16.msra.mxu0 0
      %572 = vmatprep.subr.bf16.mxu0 0
      %573 = vmatpush1.bf16.msra.mxu0 0
      %574 = vmatprep.subr.bf16.mxu0 0
      %575 = vmatpush1.bf16.msra.mxu0 0
      %576 = vmatprep.subr.bf16.mxu0 0
      %577 = vmatpush1.bf16.msra.mxu0 0
      %578 = vmatprep.subr.bf16.mxu0 0
      %579 = vmatpush1.bf16.msra.mxu0 0
      %580 = vmatprep.subr.bf16.mxu0 0
      %581 = vmatpush1.bf16.msra.mxu0 0
      %582 = vmatprep.subr.bf16.mxu0 0
      %583 = vmatpush1.bf16.msra.mxu0 %v566
      %584 = vmatprep.subr.bf16.mxu0 0
      %585 = vmatpush2.bf16.msra.mxu0 0
      %586 = vmatprep.subr.bf16.mxu0 0
      %587 = vmatpush2.bf16.msra.mxu0 0
      %588 = vmatprep.subr.bf16.mxu0 0
      %589 = vmatpush2.bf16.msra.mxu0 0
      %590 = vmatprep.subr.bf16.mxu0 0
      %591 = vmatpush2.bf16.msra.mxu0 0
      %592 = vmatprep.subr.bf16.mxu0 0
      %593 = vmatpush2.bf16.msra.mxu0 0
      %594 = vmatprep.subr.bf16.mxu0 0
      %595 = vmatpush2.bf16.msra.mxu0 0
      %596 = vmatprep.subr.bf16.mxu0 0
      %597 = vmatpush2.bf16.msra.mxu0 0
      %598 = vmatprep.subr.bf16.mxu0 0
      %599 = vmatpush2.bf16.msra.mxu0 0
      %600 = vmatprep.mubr.bf16.mxu0 0
      %601 = vmatmul.mubr.bf16.gmra.mxu0 %v563
      %v602 = vpop.f32.mrf.mxu0
      %v603 = vadd.f32 0.0, %v602
      %v604 = vpop.f32.mrf.mxu0
      %v605 = vpop.f32.mrf.mxu0
      %v606 = vpop.f32.mrf.mxu0
      %607 = vdwg.mxu0
      %v608 = vrcp.pop %v558
      %v609 = vmul.f32 %v603, %v608
      %v610 = vpack.c.bf16 %v609, %v609
      %v612 = vunpack.c.l.b16 %v610
      %v613 = vpack.c.b16 %v612, %v612
      %614 = vrot.lane.b32.xlu0 %v613, 16
      %v615 = vpop.permute.xlu0 %614
      %vm617 = vcmask 191616
      %618 = vst.msk [vmem:[#allocation2] sm:$0xf] %vm617, %v615
      %v619 = vld [vmem:[%s246] sm:$0xf]
      %v620 = vld [vmem:[%s226] sm:$0xf]
      %v622 = vunpack.c.l.b16 %v619
      %v623 = vpack.c.b16 %v622, %v622
      %624 = vrot.lane.b32.xlu0 %v623, 104
      %v625 = vpop.permute.xlu0 %624
      %v627 = vunpack.c.l.b16 %v620
      %v628 = vpack.c.b16 %v627, %v627
      %629 = vrot.lane.b32.xlu0 %v628, 72
      %v630 = vpop.permute.xlu0 %629
      %v632 = vsel %vm254, %v625, 0
      %v635 = vsel %vm254, %v630, 0
      %637 = vmatprep.subr.bf16.mxu0 0
      %638 = vmatpush1.bf16.xpose.msra.mxu0 0
      %639 = vmatprep.subr.bf16.mxu0 0
      %640 = vmatpush1.bf16.xpose.msra.mxu0 0
      %641 = vmatprep.subr.bf16.mxu0 0
      %642 = vmatpush1.bf16.xpose.msra.mxu0 0
      %643 = vmatprep.subr.bf16.mxu0 0
      %644 = vmatpush1.bf16.xpose.msra.mxu0 0
      %645 = vmatprep.subr.bf16.mxu0 0
      %646 = vmatpush1.bf16.xpose.msra.mxu0 0
      %647 = vmatprep.subr.bf16.mxu0 0
      %648 = vmatpush1.bf16.xpose.msra.mxu0 0
      %649 = vmatprep.subr.bf16.mxu0 0
      %650 = vmatpush1.bf16.xpose.msra.mxu0 0
      %651 = vmatprep.subr.bf16.mxu0 0
      %652 = vmatpush1.bf16.xpose.msra.mxu0 %v635
      %653 = vmatprep.subr.bf16.mxu0 0
      %654 = vmatpush2.bf16.xpose.msra.mxu0 0
      %655 = vmatprep.subr.bf16.mxu0 0
      %656 = vmatpush2.bf16.xpose.msra.mxu0 0
      %657 = vmatprep.subr.bf16.mxu0 0
      %658 = vmatpush2.bf16.xpose.msra.mxu0 0
      %659 = vmatprep.subr.bf16.mxu0 0
      %660 = vmatpush2.bf16.xpose.msra.mxu0 0
      %661 = vmatprep.subr.bf16.mxu0 0
      %662 = vmatpush2.bf16.xpose.msra.mxu0 0
      %663 = vmatprep.subr.bf16.mxu0 0
      %664 = vmatpush2.bf16.xpose.msra.mxu0 0
      %665 = vmatprep.subr.bf16.mxu0 0
      %666 = vmatpush2.bf16.xpose.msra.mxu0 0
      %667 = vmatprep.subr.bf16.mxu0 0
      %668 = vmatpush2.bf16.xpose.msra.mxu0 0
      %669 = vmatprep.mubr.bf16.mxu0 0
      %670 = vmatmul.mubr.bf16.gmra.mxu0 %v632
      %v671 = vpop.f32.mrf.mxu0
      %v672 = vadd.f32 0.0, %v671
      %v673 = vpop.f32.mrf.mxu0
      %v674 = vpop.f32.mrf.mxu0
      %v675 = vpop.f32.mrf.mxu0
      %676 = vdwg.mxu0
      %v677 = vsel %vm254, %v672, -inf
      %678 = vmax.xlane.f32.xlu0 %v677
      %v679 = vpop.xlane.xlu0 %678
      %v680 = vsub.f32 %v672, %v679
      %v681 = vmul.f32 %v680, 1.442695
      %v682 = vpow.pop %v681
      %v683 = vsel %vm254, %v682, 0.0
      %684 = vadd.xlane.f32.xlu0 %v683
      %v685 = vpop.xlane.xlu0 %684
      %v686 = vpack.c.bf16 %v682, %v682
      %687 = vrot.lane.b32.xlu0 %v628, 40
      %v688 = vpop.permute.xlu0 %687
      %v690 = vsel %vm254, %v686, 0
      %v693 = vsel %vm316, %v688, 0
      %695 = vmatprep.subr.bf16.mxu0 0
      %696 = vmatpush1.bf16.msra.mxu0 0
      %697 = vmatprep.subr.bf16.mxu0 0
      %698 = vmatpush1.bf16.msra.mxu0 0
      %699 = vmatprep.subr.bf16.mxu0 0
      %700 = vmatpush1.bf16.msra.mxu0 0
      %701 = vmatprep.subr.bf16.mxu0 0
      %702 = vmatpush1.bf16.msra.mxu0 0
      %703 = vmatprep.subr.bf16.mxu0 0
      %704 = vmatpush1.bf16.msra.mxu0 0
      %705 = vmatprep.subr.bf16.mxu0 0
      %706 = vmatpush1.bf16.msra.mxu0 0
      %707 = vmatprep.subr.bf16.mxu0 0
      %708 = vmatpush1.bf16.msra.mxu0 0
      %709 = vmatprep.subr.bf16.mxu0 0
      %710 = vmatpush1.bf16.msra.mxu0 %v693
      %711 = vmatprep.subr.bf16.mxu0 0
      %712 = vmatpush2.bf16.msra.mxu0 0
      %713 = vmatprep.subr.bf16.mxu0 0
      %714 = vmatpush2.bf16.msra.mxu0 0
      %715 = vmatprep.subr.bf16.mxu0 0
      %716 = vmatpush2.bf16.msra.mxu0 0
      %717 = vmatprep.subr.bf16.mxu0 0
      %718 = vmatpush2.bf16.msra.mxu0 0
      %719 = vmatprep.subr.bf16.mxu0 0
      %720 = vmatpush2.bf16.msra.mxu0 0
      %721 = vmatprep.subr.bf16.mxu0 0
      %722 = vmatpush2.bf16.msra.mxu0 0
      %723 = vmatprep.subr.bf16.mxu0 0
      %724 = vmatpush2.bf16.msra.mxu0 0
      %725 = vmatprep.subr.bf16.mxu0 0
      %726 = vmatpush2.bf16.msra.mxu0 0
      %727 = vmatprep.mubr.bf16.mxu0 0
      %728 = vmatmul.mubr.bf16.gmra.mxu0 %v690
      %v729 = vpop.f32.mrf.mxu0
      %v730 = vadd.f32 0.0, %v729
      %v731 = vpop.f32.mrf.mxu0
      %v732 = vpop.f32.mrf.mxu0
      %v733 = vpop.f32.mrf.mxu0
      %734 = vdwg.mxu0
      %v735 = vrcp.pop %v685
      %v736 = vmul.f32 %v730, %v735
      %v737 = vpack.c.bf16 %v736, %v736
      %v739 = vunpack.c.l.b16 %v737
      %v740 = vpack.c.b16 %v739, %v739
      %741 = vrot.lane.b32.xlu0 %v740, 24
      %v742 = vpop.permute.xlu0 %741
      %vm744 = vcmask 257216
      %745 = vst.msk [vmem:[#allocation2] sm:$0xf] %vm744, %v742
      %v746 = vld [vmem:[#allocation2] sm:$0xf]
      %v747 = vld [vmem:[%s2] sm:$0xf]
      %v748 = vld [vmem:[%s2 + $0x4] sm:$0xf]
      %v749 = vld [vmem:[%s2 + $0x8] sm:$0xf]
      %v750 = vld [vmem:[%s2 + $0xc] sm:$0xf]
      %v751 = vld [vmem:[%s3] sm:$0x1]
      %v753 = vlaneseq
      %v754 = vshrl.u32 %v753, 7
      %v755 = vsub.s32 0, %v754
      %v756 = vrot.slane %v751, %v755
      %v762 = vunpack.c.l.b16 %v747
      %v763 = vunpack.c.l.b16 %v748
      %v764 = vunpack.c.l.b16 %v749
      %v765 = vunpack.c.l.b16 %v750
      %v766 = vpack.c.b16 %v763, %v762
      %v767 = vpack.c.b16 %v765, %v764
      %vm770 = vcmask 261120
      %v772 = vsel %vm770, %v746, 0
      %774 = vmatprep.subr.bf16.mxu0 0
      %775 = vmatpush1.bf16.msra.mxu0 0
      %776 = vmatprep.subr.bf16.mxu0 0
      %777 = vmatpush1.bf16.msra.mxu0 0
      %778 = vmatprep.subr.bf16.mxu0 0
      %779 = vmatpush1.bf16.msra.mxu0 0
      %780 = vmatprep.subr.bf16.mxu0 0
      %781 = vmatpush1.bf16.msra.mxu0 0
      %782 = vmatprep.subr.bf16.mxu0 0
      %783 = vmatpush1.bf16.msra.mxu0 0
      %784 = vmatprep.subr.bf16.mxu0 0
      %785 = vmatpush1.bf16.msra.mxu0 0
      %786 = vmatprep.subr.bf16.mxu0 0
      %787 = vmatpush1.bf16.msra.mxu0 %v767
      %788 = vmatprep.subr.bf16.mxu0 0
      %789 = vmatpush1.bf16.msra.mxu0 %v766
      %790 = vmatprep.subr.bf16.mxu0 0
      %791 = vmatpush2.bf16.msra.mxu0 0
      %792 = vmatprep.subr.bf16.mxu0 0
      %793 = vmatpush2.bf16.msra.mxu0 0
      %794 = vmatprep.subr.bf16.mxu0 0
      %795 = vmatpush2.bf16.msra.mxu0 0
      %796 = vmatprep.subr.bf16.mxu0 0
      %797 = vmatpush2.bf16.msra.mxu0 0
      %798 = vmatprep.subr.bf16.mxu0 0
      %799 = vmatpush2.bf16.msra.mxu0 0
      %800 = vmatprep.subr.bf16.mxu0 0
      %801 = vmatpush2.bf16.msra.mxu0 0
      %802 = vmatprep.subr.bf16.mxu0 0
      %803 = vmatpush2.bf16.msra.mxu0 0
      %804 = vmatprep.subr.bf16.mxu0 0
      %805 = vmatpush2.bf16.msra.mxu0 0
      %806 = vmatprep.mubr.bf16.mxu0 0
      %807 = vmatmul.mubr.bf16.gmra.mxu0 %v772
      %v808 = vpop.f32.mrf.mxu0
      %v809 = vadd.f32 %v756, %v808
      %v810 = vpop.f32.mrf.mxu0
      %v811 = vpop.f32.mrf.mxu0
      %v812 = vpop.f32.mrf.mxu0
      %813 = vdwg.mxu0
      %v814 = vld [vmem:[%s233] sm:$0xff]
      %v815 = vadd.f32 %v809, %v814
      %816 = vst.msk [vmem:[%s240] sm:$0xff] %vm770, %v815
      %p817 = scmp.lt.s32.totalorder %s19, 1
      %s818 = scalar_select %p817, %s19, 1
      %p819 = scmp.lt.s32.totalorder %s20, 0
      %s820 = scalar_select %p819, %s20, 0
      %s821 = sadd.s32 %s820, %s818
      %s822 = smul.addr %s821, 8
      %s823 = scalar_lea.vmem %s4, %s822
      // Predicated region
      $region37: #{neural_model_forward.10} parent=35 // pred_check
        %p824 = pneg %p143
      $region38: #{neural_model_forward.10} parent=35 // pred_check_branch
        %826 = sbr.rel (%p824) target = $region40
      $region39: #{neural_model_forward.10} parent=35 // pred_region
        _
      $region40: #{neural_model_forward.10} parent=35 // pred_fallthru
        _
    $region36: #{neural_model_forward.10} parent=5 // pred_fallthru
      _
    %p827 = scmp.le.s32.totalorder 2, %s10
    // Predicated region
    $region41: #{neural_model_forward.10} parent=5 // pred_check
      %p828 = pneg %p827
    $region42: #{neural_model_forward.10} parent=5 // pred_check_branch
      %830 = sbr.rel (%p828) target = $region44
    $region43: #{neural_model_forward.10} parent=5 // pred_region
      %s831 = ssub.s32 %s10, 2
      // Predicated region
      $region45: #{neural_model_forward.10} parent=43 // pred_check
        %p832 = pneg %p149
      $region46: #{neural_model_forward.10} parent=43 // pred_check_branch
        %834 = sbr.rel (%p832) target = $region48
      $region47: #{neural_model_forward.10} parent=43 // pred_region
        %p835 = scmp.lt.s32.totalorder %s21, 1
        %s836 = scalar_select %p835, %s21, 1
        %p837 = scmp.lt.s32.totalorder %s22, 0
        %s838 = scalar_select %p837, %s22, 0
        %s839 = sadd.s32 %s838, %s836
        %s840 = smul.addr %s839, 8
        %s841 = scalar_lea.vmem %s4, %s840
      $region48: #{neural_model_forward.10} parent=43 // pred_fallthru
        _
    $region44: #{neural_model_forward.10} parent=5 // pred_fallthru
      _
  $region6: #{neural_model_forward.10} parent=0 // loop_footer
    %s14 = sadd.s32 1, %s10
  $region7: #{neural_model_forward.10} parent=0 // loop_footer_branch
    %9 = sbr.rel target = $region3
  $region8: #{neural_model_forward.10} parent=0 // loop_exit
    _

// kernel: neural_model_forward.11
$region0: #{neural_model_forward.11}
  #allocation0 [shape = 'u32[]', space=smem, size = 0x4, offset = 0x4, fixed_abs, tag = 'smem constant byte address 0x4 - core index']
  #allocation1 [shape = 'u32[144,128]{1,0:T(1,128)}', space=vmem, size = 0x12000, scoped, tag = 'internal scratch']
  #allocation2 [shape = 'bf16[16,32]{1,0:T(8,128)(2,1)}', space=vmem, size = 0x1000, scoped, tag = 'scratch operand']
  %s0 = inlined_call_operand.vmem [shape: f32[16,32], index: 0, kind: input, shape index: {}]
  %s1 = inlined_call_operand.vmem [shape: f32[1,32], index: 1, kind: input, shape index: {}]
  %s2 = inlined_call_operand.vmem [shape: f32[1,32], index: 2, kind: input, shape index: {}]
  %s3 = inlined_call_operand.vmem [shape: bf16[32,128], index: 3, kind: input, shape index: {}]
  %s4 = inlined_call_operand.vmem [shape: f32[1,128], index: 4, kind: input, shape index: {}]
  %s5 = inlined_call_operand.vmem [shape: bf16[128,32], index: 5, kind: input, shape index: {}]
  %s6 = inlined_call_operand.vmem [shape: f32[1,32], index: 6, kind: input, shape index: {}]
  %s7 = inlined_call_operand.vmem [shape: f32[16,32], index: 7, kind: output, shape index: {}]
  %s8 = sld [smem:[#allocation0]]
  $region42: #{neural_model_forward.11} parent=0
    _
  %s10 = ssub.s32 1, %s8
  %s11 = scalar_select 0, %s10, %s8
  // Predicated region
  $region2: #{neural_model_forward.11} parent=0 // pred_check
    _
  $region3: #{neural_model_forward.11} parent=0 // pred_check_branch
    %13 = sbr.rel (0) target = $region5
  $region4: #{neural_model_forward.11} parent=0 // pred_region
    _
  $region5: #{neural_model_forward.11} parent=0 // pred_fallthru
    _
  // Predicated region
  $region6: #{neural_model_forward.11} parent=0 // pred_check
    _
  $region7: #{neural_model_forward.11} parent=0 // pred_check_branch
    %15 = sbr.rel (0) target = $region9
  $region8: #{neural_model_forward.11} parent=0 // pred_region
    _
  $region9: #{neural_model_forward.11} parent=0 // pred_fallthru
    _
  // Predicated region
  $region10: #{neural_model_forward.11} parent=0 // pred_check
    _
  $region11: #{neural_model_forward.11} parent=0 // pred_check_branch
    %17 = sbr.rel (0) target = $region13
  $region12: #{neural_model_forward.11} parent=0 // pred_region
    _
  $region13: #{neural_model_forward.11} parent=0 // pred_fallthru
    _
  // Predicated region
  $region14: #{neural_model_forward.11} parent=0 // pred_check
    _
  $region15: #{neural_model_forward.11} parent=0 // pred_check_branch
    %19 = sbr.rel (0) target = $region17
  $region16: #{neural_model_forward.11} parent=0 // pred_region
    _
  $region17: #{neural_model_forward.11} parent=0 // pred_fallthru
    _
  // Predicated region
  $region18: #{neural_model_forward.11} parent=0 // pred_check
    _
  $region19: #{neural_model_forward.11} parent=0 // pred_check_branch
    %21 = sbr.rel (0) target = $region21
  $region20: #{neural_model_forward.11} parent=0 // pred_region
    _
  $region21: #{neural_model_forward.11} parent=0 // pred_fallthru
    _
  // Predicated region
  $region22: #{neural_model_forward.11} parent=0 // pred_check
    _
  $region23: #{neural_model_forward.11} parent=0 // pred_check_branch
    %23 = sbr.rel (0) target = $region25
  $region24: #{neural_model_forward.11} parent=0 // pred_region
    _
  $region25: #{neural_model_forward.11} parent=0 // pred_fallthru
    _
  // Predicated region
  $region26: #{neural_model_forward.11} parent=0 // pred_check
    _
  $region27: #{neural_model_forward.11} parent=0 // pred_check_branch
    %25 = sbr.rel (0) target = $region29
  $region28: #{neural_model_forward.11} parent=0 // pred_region
    _
  $region29: #{neural_model_forward.11} parent=0 // pred_fallthru
    _
  %p27 = scmp.eq.s32.totalorder 0, 0
  // Predicated region
  $region30: #{neural_model_forward.11} parent=0 // pred_check
    %p28 = pneg %p27
  $region31: #{neural_model_forward.11} parent=0 // pred_check_branch
    %30 = sbr.rel (%p28) target = $region33
  $region32: #{neural_model_forward.11} parent=0 // pred_region
    %v31 = vld [vmem:[%s0] sm:$0xff]
    %v32 = vld [vmem:[%s0 + $0x8] sm:$0xff]
    %vm33 = vcmask 261120
    %v34 = vsel %vm33, %v31, 0.0
    %35 = vadd.xlane.f32.xlu0 %v34
    %v36 = vpop.xlane.xlu0 %35
    %v37 = vsel %vm33, %v32, 0.0
    %38 = vadd.xlane.f32.xlu0 %v37
    %v39 = vpop.xlane.xlu0 %38
    %v40 = vrcp.pop 32.0
    %v41 = vmul.f32 %v36, %v40
    %v42 = vmul.f32 %v39, %v40
    %v43 = vsub.f32 %v31, %v41
    %v44 = vsub.f32 %v32, %v42
    %v45 = vmul.f32 %v43, %v43
    %v46 = vmul.f32 %v44, %v44
    %v47 = vsel %vm33, %v45, 0.0
    %48 = vadd.xlane.f32.xlu0 %v47
    %v49 = vpop.xlane.xlu0 %48
    %v50 = vsel %vm33, %v46, 0.0
    %51 = vadd.xlane.f32.xlu0 %v50
    %v52 = vpop.xlane.xlu0 %51
    %v53 = vmul.f32 %v49, %v40
    %v54 = vmul.f32 %v52, %v40
    %v55 = vadd.f32 %v53, 1e-05
    %v56 = vadd.f32 %v54, 1e-05
    %v57 = vrsqrt.pop %v55
    %v58 = vrsqrt.pop %v56
    %v59 = vmul.f32 %v43, %v57
    %v60 = vmul.f32 %v44, %v58
    %v61 = vld [vmem:[%s1] sm:$0x1]
    %v63 = vlaneseq
    %v64 = vshrl.u32 %v63, 7
    %v65 = vsub.s32 0, %v64
    %v66 = vrot.slane %v61, %v65
    %v68 = vmul.f32 %v59, %v66
    %v69 = vmul.f32 %v60, %v66
    %v70 = vld [vmem:[%s2] sm:$0x1]
    %v72 = vlaneseq
    %v73 = vshrl.u32 %v72, 7
    %v74 = vsub.s32 0, %v73
    %v75 = vrot.slane %v70, %v74
    %v77 = vadd.f32 %v68, %v75
    %v78 = vadd.f32 %v69, %v75
    %v79 = vpack.c.bf16 %v78, %v77
    %v81 = vunpack.c.l.b16 %v79
    %v82 = vunpack.c.h.b16 %v79
    %v83 = vpack.c.b16 %v81, %v81
    %v84 = vpack.c.b16 %v82, %v82
    %vm87 = vcmask 257024
    %88 = vst.msk [vmem:[#allocation2] sm:$0xf] %vm87, %v83
    %89 = vst.msk [vmem:[#allocation2 + $0x4] sm:$0xf] %vm87, %v84
    %v90 = vld [vmem:[%s6] sm:$0x1]
    %v92 = vlaneseq
    %v93 = vshrl.u32 %v92, 7
    %v94 = vsub.s32 0, %v93
    %v95 = vrot.slane %v90, %v94
    %v97 = vadd.f32 %v31, %v95
    %v98 = vadd.f32 %v32, %v95
    %99 = vst.msk [vmem:[%s7] sm:$0xff] %vm33, %v97
    %100 = vst.msk [vmem:[%s7 + $0x8] sm:$0xff] %vm33, %v98
  $region33: #{neural_model_forward.11} parent=0 // pred_fallthru
    _
  %v101 = vld [vmem:[#allocation2] sm:$0xf]
  %v102 = vld [vmem:[#allocation2 + $0x4] sm:$0xf]
  %v103 = vld [vmem:[%s3] sm:$0xf]
  %v104 = vld [vmem:[%s3 + $0x4] sm:$0xf]
  %v105 = vld [vmem:[%s3 + $0x8] sm:$0xf]
  %v106 = vld [vmem:[%s3 + $0xc] sm:$0xf]
  %v107 = vld [vmem:[%s4] sm:$0x1]
  %v109 = vlaneseq
  %v110 = vshrl.u32 %v109, 7
  %v111 = vsub.s32 0, %v110
  %v112 = vrot.slane %v107, %v111
  %v116 = vunpack.c.l.b16 %v101
  %v117 = vunpack.c.l.b16 %v102
  %v118 = vpack.c.b16 %v117, %v116
  %v123 = vunpack.c.l.b16 %v103
  %v124 = vunpack.c.l.b16 %v104
  %v125 = vunpack.c.l.b16 %v105
  %v126 = vunpack.c.l.b16 %v106
  %v127 = vpack.c.b16 %v124, %v123
  %v128 = vpack.c.b16 %v126, %v125
  %vm131 = vcmask 261120
  %v133 = vsel %vm131, %v118, 0
  %135 = vmatprep.subr.bf16.mxu0 0
  %136 = vmatpush1.bf16.msra.mxu0 0
  %137 = vmatprep.subr.bf16.mxu0 0
  %138 = vmatpush1.bf16.msra.mxu0 0
  %139 = vmatprep.subr.bf16.mxu0 0
  %140 = vmatpush1.bf16.msra.mxu0 0
  %141 = vmatprep.subr.bf16.mxu0 0
  %142 = vmatpush1.bf16.msra.mxu0 0
  %143 = vmatprep.subr.bf16.mxu0 0
  %144 = vmatpush1.bf16.msra.mxu0 0
  %145 = vmatprep.subr.bf16.mxu0 0
  %146 = vmatpush1.bf16.msra.mxu0 0
  %147 = vmatprep.subr.bf16.mxu0 0
  %148 = vmatpush1.bf16.msra.mxu0 %v128
  %149 = vmatprep.subr.bf16.mxu0 0
  %150 = vmatpush1.bf16.msra.mxu0 %v127
  %151 = vmatprep.subr.bf16.mxu0 0
  %152 = vmatpush2.bf16.msra.mxu0 0
  %153 = vmatprep.subr.bf16.mxu0 0
  %154 = vmatpush2.bf16.msra.mxu0 0
  %155 = vmatprep.subr.bf16.mxu0 0
  %156 = vmatpush2.bf16.msra.mxu0 0
  %157 = vmatprep.subr.bf16.mxu0 0
  %158 = vmatpush2.bf16.msra.mxu0 0
  %159 = vmatprep.subr.bf16.mxu0 0
  %160 = vmatpush2.bf16.msra.mxu0 0
  %161 = vmatprep.subr.bf16.mxu0 0
  %162 = vmatpush2.bf16.msra.mxu0 0
  %163 = vmatprep.subr.bf16.mxu0 0
  %164 = vmatpush2.bf16.msra.mxu0 0
  %165 = vmatprep.subr.bf16.mxu0 0
  %166 = vmatpush2.bf16.msra.mxu0 0
  %167 = vmatprep.mubr.bf16.mxu0 0
  %168 = vmatmul.mubr.bf16.gmra.mxu0 %v133
  %v169 = vpop.f32.mrf.mxu0
  %v170 = vadd.f32 %v112, %v169
  %v171 = vpop.f32.mrf.mxu0
  %v172 = vpop.f32.mrf.mxu0
  %v173 = vadd.f32 %v112, %v172
  %v174 = vpop.f32.mrf.mxu0
  %175 = vdwg.mxu0
  %v176 = vmul.f32 %v170, %v170
  %v177 = vmul.f32 %v173, %v173
  %v178 = vmul.f32 %v170, %v176
  %v179 = vmul.f32 %v173, %v177
  %v180 = vmul.f32 %v178, 0.044715
  %v181 = vmul.f32 %v179, 0.044715
  %v182 = vadd.f32 %v170, %v180
  %v183 = vadd.f32 %v173, %v181
  %v184 = vmul.f32 %v182, 0.7978846
  %v185 = vmul.f32 %v183, 0.7978846
  %v186 = vtanh.pop %v184
  %v187 = vtanh.pop %v185
  %v188 = vadd.f32 %v186, 1.0
  %v189 = vadd.f32 %v187, 1.0
  %v190 = vmul.f32 %v188, 0.5
  %v191 = vmul.f32 %v189, 0.5
  %v192 = vmul.f32 %v170, %v190
  %v193 = vmul.f32 %v173, %v191
  %v194 = vld [vmem:[%s7] sm:$0xff]
  %v195 = vld [vmem:[%s7 + $0x8] sm:$0xff]
  %v196 = vpack.c.bf16 %v193, %v192
  %v197 = vld [vmem:[%s5] sm:$0xf]
  %v198 = vld [vmem:[%s5 + $0x4] sm:$0xf]
  %v199 = vld [vmem:[%s5 + $0x8] sm:$0xf]
  %v200 = vld [vmem:[%s5 + $0xc] sm:$0xf]
  %v201 = vld [vmem:[%s5 + $0x10] sm:$0xf]
  %v202 = vld [vmem:[%s5 + $0x14] sm:$0xf]
  %v203 = vld [vmem:[%s5 + $0x18] sm:$0xf]
  %v204 = vld [vmem:[%s5 + $0x1c] sm:$0xf]
  %v205 = vld [vmem:[%s5 + $0x20] sm:$0xf]
  %v206 = vld [vmem:[%s5 + $0x24] sm:$0xf]
  %v207 = vld [vmem:[%s5 + $0x28] sm:$0xf]
  %v208 = vld [vmem:[%s5 + $0x2c] sm:$0xf]
  %v209 = vld [vmem:[%s5 + $0x30] sm:$0xf]
  %v210 = vld [vmem:[%s5 + $0x34] sm:$0xf]
  %v211 = vld [vmem:[%s5 + $0x38] sm:$0xf]
  %v212 = vld [vmem:[%s5 + $0x3c] sm:$0xf]
  %v229 = vunpack.c.l.b16 %v197
  %v230 = vunpack.c.l.b16 %v198
  %v231 = vunpack.c.l.b16 %v199
  %v232 = vunpack.c.l.b16 %v200
  %v233 = vunpack.c.l.b16 %v201
  %v234 = vunpack.c.l.b16 %v202
  %v235 = vunpack.c.l.b16 %v203
  %v236 = vunpack.c.l.b16 %v204
  %v237 = vunpack.c.l.b16 %v205
  %v238 = vunpack.c.l.b16 %v206
  %v239 = vunpack.c.l.b16 %v207
  %v240 = vunpack.c.l.b16 %v208
  %v241 = vunpack.c.l.b16 %v209
  %v242 = vunpack.c.l.b16 %v210
  %v243 = vunpack.c.l.b16 %v211
  %v244 = vunpack.c.l.b16 %v212
  %v245 = vpack.c.b16 %v230, %v229
  %v246 = vpack.c.b16 %v232, %v231
  %v247 = vpack.c.b16 %v234, %v233
  %v248 = vpack.c.b16 %v236, %v235
  %v249 = vpack.c.b16 %v238, %v237
  %v250 = vpack.c.b16 %v240, %v239
  %v251 = vpack.c.b16 %v242, %v241
  %v252 = vpack.c.b16 %v244, %v243
  %261 = vmatprep.subr.bf16.mxu0 0
  %262 = vmatpush1.bf16.msra.mxu0 %v252
  %263 = vmatprep.subr.bf16.mxu0 0
  %264 = vmatpush1.bf16.msra.mxu0 %v251
  %265 = vmatprep.subr.bf16.mxu0 0
  %266 = vmatpush1.bf16.msra.mxu0 %v250
  %267 = vmatprep.subr.bf16.mxu0 0
  %268 = vmatpush1.bf16.msra.mxu0 %v249
  %269 = vmatprep.subr.bf16.mxu0 0
  %270 = vmatpush1.bf16.msra.mxu0 %v248
  %271 = vmatprep.subr.bf16.mxu0 0
  %272 = vmatpush1.bf16.msra.mxu0 %v247
  %273 = vmatprep.subr.bf16.mxu0 0
  %274 = vmatpush1.bf16.msra.mxu0 %v246
  %275 = vmatprep.subr.bf16.mxu0 0
  %276 = vmatpush1.bf16.msra.mxu0 %v245
  %277 = vmatprep.subr.bf16.mxu0 0
  %278 = vmatpush2.bf16.msra.mxu0 0
  %279 = vmatprep.subr.bf16.mxu0 0
  %280 = vmatpush2.bf16.msra.mxu0 0
  %281 = vmatprep.subr.bf16.mxu0 0
  %282 = vmatpush2.bf16.msra.mxu0 0
  %283 = vmatprep.subr.bf16.mxu0 0
  %284 = vmatpush2.bf16.msra.mxu0 0
  %285 = vmatprep.subr.bf16.mxu0 0
  %286 = vmatpush2.bf16.msra.mxu0 0
  %287 = vmatprep.subr.bf16.mxu0 0
  %288 = vmatpush2.bf16.msra.mxu0 0
  %289 = vmatprep.subr.bf16.mxu0 0
  %290 = vmatpush2.bf16.msra.mxu0 0
  %291 = vmatprep.subr.bf16.mxu0 0
  %292 = vmatpush2.bf16.msra.mxu0 0
  %293 = vmatprep.mubr.bf16.mxu0 0
  %294 = vmatmul.mubr.bf16.gmra.mxu0 %v196
  %v295 = vpop.f32.mrf.mxu0
  %v296 = vadd.f32 0.0, %v295
  %v297 = vpop.f32.mrf.mxu0
  %v298 = vpop.f32.mrf.mxu0
  %v299 = vadd.f32 0.0, %v298
  %v300 = vpop.f32.mrf.mxu0
  %301 = vdwg.mxu0
  %v302 = vadd.f32 %v194, %v296
  %v303 = vadd.f32 %v195, %v299
  %304 = vst.msk [vmem:[%s7] sm:$0xff] %vm131, %v302
  %305 = vst.msk [vmem:[%s7 + $0x8] sm:$0xff] %vm131, %v303
  // Predicated region
  $region34: #{neural_model_forward.11} parent=0 // pred_check
    _
  $region35: #{neural_model_forward.11} parent=0 // pred_check_branch
    %307 = sbr.rel (0) target = $region37
  $region36: #{neural_model_forward.11} parent=0 // pred_region
    _
  $region37: #{neural_model_forward.11} parent=0 // pred_fallthru
    _
  // Predicated region
  $region38: #{neural_model_forward.11} parent=0 // pred_check
    _
  $region39: #{neural_model_forward.11} parent=0 // pred_check_branch
    %309 = sbr.rel (0) target = $region41
  $region40: #{neural_model_forward.11} parent=0 // pred_region
    _
  $region41: #{neural_model_forward.11} parent=0 // pred_fallthru
    _

// kernel: neural_model_forward.15
$region0: #{neural_model_forward.15}
  #allocation0 [shape = 'u32[]', space=smem, size = 0x4, offset = 0x4, fixed_abs, tag = 'smem constant byte address 0x4 - core index']
  #allocation1 [shape = 'u32[144,128]{1,0:T(1,128)}', space=vmem, size = 0x12000, scoped, tag = 'internal scratch']
  %s0 = inlined_call_operand.vmem [shape: f32[16,32], index: 0, kind: input, shape index: {}]
  %s1 = inlined_call_operand.vmem [shape: bf16[32,256], index: 1, kind: input, shape index: {}]
  %s2 = inlined_call_operand.vmem [shape: f32[1,256], index: 2, kind: input, shape index: {}]
  %s3 = inlined_call_operand.vmem [shape: f32[16,256], index: 3, kind: output, shape index: {}]
  %s4 = sld [smem:[#allocation0]]
  $region22: #{neural_model_forward.15} parent=0
    _
  %s6 = ssub.s32 1, %s4
  %s7 = scalar_select 0, %s6, %s4
  // Predicated region
  $region2: #{neural_model_forward.15} parent=0 // pred_check
    _
  $region3: #{neural_model_forward.15} parent=0 // pred_check_branch
    %9 = sbr.rel (0) target = $region5
  $region4: #{neural_model_forward.15} parent=0 // pred_region
    _
  $region5: #{neural_model_forward.15} parent=0 // pred_fallthru
    _
  // Predicated region
  $region6: #{neural_model_forward.15} parent=0 // pred_check
    _
  $region7: #{neural_model_forward.15} parent=0 // pred_check_branch
    %11 = sbr.rel (0) target = $region9
  $region8: #{neural_model_forward.15} parent=0 // pred_region
    _
  $region9: #{neural_model_forward.15} parent=0 // pred_fallthru
    _
  // Predicated region
  $region10: #{neural_model_forward.15} parent=0 // pred_check
    _
  $region11: #{neural_model_forward.15} parent=0 // pred_check_branch
    %13 = sbr.rel (0) target = $region13
  $region12: #{neural_model_forward.15} parent=0 // pred_region
    _
  $region13: #{neural_model_forward.15} parent=0 // pred_fallthru
    _
  %v15 = vld [vmem:[%s0] sm:$0xff]
  %v16 = vld [vmem:[%s0 + $0x8] sm:$0xff]
  %v17 = vpack.c.bf16 %v16, %v15
  %v18 = vld [vmem:[%s1] sm:$0xff]
  %v19 = vld [vmem:[%s1 + $0x8] sm:$0xff]
  %v20 = vld [vmem:[%s1 + $0x10] sm:$0xff]
  %v21 = vld [vmem:[%s1 + $0x18] sm:$0xff]
  %v22 = vld [vmem:[%s2] sm:$0x3]
  %v24 = vlaneseq
  %v25 = vshrl.u32 %v24, 7
  %v26 = vsub.s32 0, %v25
  %v27 = vrot.slane %v22, %v26
  %v28 = vlaneseq
  %v29 = vshrl.u32 %v28, 7
  %v30 = vsub.s32 1, %v29
  %v31 = vrot.slane %v22, %v30
  %v38 = vunpack.c.l.b16 %v18
  %v39 = vunpack.c.h.b16 %v18
  %v40 = vunpack.c.l.b16 %v19
  %v41 = vunpack.c.h.b16 %v19
  %v42 = vunpack.c.l.b16 %v20
  %v43 = vunpack.c.h.b16 %v20
  %v44 = vunpack.c.l.b16 %v21
  %v45 = vunpack.c.h.b16 %v21
  %v46 = vpack.c.b16 %v40, %v38
  %v47 = vpack.c.b16 %v41, %v39
  %v48 = vpack.c.b16 %v44, %v42
  %v49 = vpack.c.b16 %v45, %v43
  %vm54 = vcmask 261120
  %v56 = vsel %vm54, %v17, 0
  %58 = vmatprep.subr.bf16.mxu0 0
  %59 = vmatpush1.bf16.msra.mxu0 0
  %60 = vmatprep.subr.bf16.mxu0 0
  %61 = vmatpush1.bf16.msra.mxu0 0
  %62 = vmatprep.subr.bf16.mxu0 0
  %63 = vmatpush1.bf16.msra.mxu0 0
  %64 = vmatprep.subr.bf16.mxu0 0
  %65 = vmatpush1.bf16.msra.mxu0 0
  %66 = vmatprep.subr.bf16.mxu0 0
  %67 = vmatpush1.bf16.msra.mxu0 0
  %68 = vmatprep.subr.bf16.mxu0 0
  %69 = vmatpush1.bf16.msra.mxu0 0
  %70 = vmatprep.subr.bf16.mxu0 %v49
  %71 = vmatpush1.bf16.msra.mxu0 %v48
  %72 = vmatprep.subr.bf16.mxu0 %v47
  %73 = vmatpush1.bf16.msra.mxu0 %v46
  %74 = vmatprep.subr.bf16.mxu0 0
  %75 = vmatpush2.bf16.msra.mxu0 0
  %76 = vmatprep.subr.bf16.mxu0 0
  %77 = vmatpush2.bf16.msra.mxu0 0
  %78 = vmatprep.subr.bf16.mxu0 0
  %79 = vmatpush2.bf16.msra.mxu0 0
  %80 = vmatprep.subr.bf16.mxu0 0
  %81 = vmatpush2.bf16.msra.mxu0 0
  %82 = vmatprep.subr.bf16.mxu0 0
  %83 = vmatpush2.bf16.msra.mxu0 0
  %84 = vmatprep.subr.bf16.mxu0 0
  %85 = vmatpush2.bf16.msra.mxu0 0
  %86 = vmatprep.subr.bf16.mxu0 0
  %87 = vmatpush2.bf16.msra.mxu0 0
  %88 = vmatprep.subr.bf16.mxu0 0
  %89 = vmatpush2.bf16.msra.mxu0 0
  %90 = vmatprep.mubr.bf16.mxu0 0
  %91 = vmatmul.mubr.bf16.gmra.mxu0 %v56
  %v92 = vpop.f32.mrf.mxu0
  %v93 = vadd.f32 %v27, %v92
  %v94 = vpop.f32.mrf.mxu0
  %v95 = vadd.f32 %v31, %v94
  %v96 = vpop.f32.mrf.mxu0
  %v97 = vadd.f32 %v27, %v96
  %v98 = vpop.f32.mrf.mxu0
  %v99 = vadd.f32 %v31, %v98
  %100 = vdwg.mxu0
  %v101 = vxor.u32 %v93, 2147483648
  %v102 = vxor.u32 %v95, 2147483648
  %v103 = vxor.u32 %v97, 2147483648
  %v104 = vxor.u32 %v99, 2147483648
  %v105 = vmul.f32 %v101, 1.442695
  %v106 = vpow.pop %v105
  %v107 = vmul.f32 %v102, 1.442695
  %v108 = vpow.pop %v107
  %v109 = vmul.f32 %v103, 1.442695
  %v110 = vpow.pop %v109
  %v111 = vmul.f32 %v104, 1.442695
  %v112 = vpow.pop %v111
  %v113 = vadd.f32 %v106, 1.0
  %v114 = vadd.f32 %v108, 1.0
  %v115 = vadd.f32 %v110, 1.0
  %v116 = vadd.f32 %v112, 1.0
  %v117 = vrcp.pop %v113
  %v118 = vmul.f32 1.0, %v117
  %v119 = vrcp.pop %v114
  %v120 = vmul.f32 1.0, %v119
  %v121 = vrcp.pop %v115
  %v122 = vmul.f32 1.0, %v121
  %v123 = vrcp.pop %v116
  %v124 = vmul.f32 1.0, %v123
  %125 = vst [vmem:[%s3] sm:$0xff] %v118
  %126 = vst [vmem:[%s3 + $0x8] sm:$0xff] %v120
  %127 = vst [vmem:[%s3 + $0x10] sm:$0xff] %v122
  %128 = vst [vmem:[%s3 + $0x18] sm:$0xff] %v124
  // Predicated region
  $region14: #{neural_model_forward.15} parent=0 // pred_check
    _
  $region15: #{neural_model_forward.15} parent=0 // pred_check_branch
    %130 = sbr.rel (0) target = $region17
  $region16: #{neural_model_forward.15} parent=0 // pred_region
    _
  $region17: #{neural_model_forward.15} parent=0 // pred_fallthru
    _
  // Predicated region
  $region18: #{neural_model_forward.15} parent=0 // pred_check
    _
  $region19: #{neural_model_forward.15} parent=0 // pred_check_branch
    %132 = sbr.rel (0) target = $region21
  $region20: #{neural_model_forward.15} parent=0 // pred_region
    _
  $region21: #{neural_model_forward.15} parent=0 // pred_fallthru
    _

</llo_original>
